<compile_context>
chip_gen: v7x
topology: tpu7x:2x2x1
jax: 0.10.0
libtpu: 0.0.40
codegen_flags: <defaults>
</compile_context>

<pallas_src>
import math
import functools

import jax
import jax.numpy as jnp
from jax.experimental import pallas as pl
from jax.experimental.pallas import tpu as pltpu


# ------------------------------- Pallas kernel ------------------------------- #
def exp_model_kernel(x0_ref, w_ref, isel_ref,
                     bagg_ref, ga_ref, ba_ref,
                     bd1_ref, bb1_ref, bd2_ref, bb2_ref,
                     gf_ref, bf_ref,
                     pool_ref, wout_ref,
                     out_ref):
    f32 = jnp.float32
    x = x0_ref[...]            # (N, F*C)  token + positional embeddings, flattened
    w = w_ref[...]             # (N, F*C)  aggregation mask (I+S), * 1/|m| for mean-reduce
    isel = isel_ref[...]       # (N, F*C)  one-hot target-feature selector, expanded
    pool = pool_ref[...]       # (F*C, F*C) per-feature channel-mean block matrix
    n_layers = bagg_ref.shape[0]   # static

    def layer_norm(v, gamma, beta, eps=1e-5):
        # LayerNorm over each feature's C channels in the flattened layout:
        # group mean / biased variance via the block pooling matrix.
        mean = jnp.dot(v, pool, preferred_element_type=f32)
        d = v - mean
        var = jnp.dot(d * d, pool, preferred_element_type=f32)
        return d * jax.lax.rsqrt(var + eps) * gamma + beta

    for i in range(n_layers):  # static unroll (n_layers = 2)
        # masked per-head adjacency aggregation, folded into one wide matmul
        y = jnp.dot(x * w, bagg_ref[i], preferred_element_type=f32)
        x = x + layer_norm(y, ga_ref[i], ba_ref[i])
        # FFN (Linear -> ReLU -> Linear), block-diagonal over the feature axis
        h = jnp.dot(x, bd1_ref[i], preferred_element_type=f32) + bb1_ref[i]
        h = jnp.maximum(h, 0.0)
        h = jnp.dot(h, bd2_ref[i], preferred_element_type=f32) + bb2_ref[i]
        x = x + layer_norm(h, gf_ref[i], bf_ref[i])

    # select the target feature's embedding and project onto the vocab embedding;
    # output is padded to 128 lanes (unmasked full-width store), sliced outside.
    out_ref[...] = jnp.dot(x * isel, wout_ref[...], preferred_element_type=f32)


# ------------------------------ parameter packing ---------------------------- #
def pack_params(params, n_features, n_vocab, embedding_dim, n_heads):
    """Build the static block matrices consumed by the kernel."""
    F_, C, H = n_features, embedding_dim, n_heads
    d = C // H
    eyeF = jnp.eye(F_, dtype=jnp.float32)
    eyeC = jnp.eye(C, dtype=jnp.float32)

    def build_bagg(A):                       # A: (H, F, F) -> (F*C, F*C)
        Ach = jnp.repeat(A, d, axis=0)       # (C, F, F): Ach[c] = A[c // d]
        B4 = jnp.einsum('cts,cz->sctz', Ach, eyeC)   # (F_s, C_in, F_t, C_out)
        return B4.reshape(F_ * C, F_ * C)

    def blockdiag(W):                        # W: (C_in, C_out) -> kron(I_F, W)
        return jnp.kron(eyeF, W)

    def tile_vec(v):                         # (C,) -> (1, F*C)
        return jnp.tile(v, F_).reshape(1, F_ * C)

    bagg = jnp.stack([build_bagg(a) for a in params["agg"]])     # (L, F*C, F*C)
    bd1 = jnp.stack([blockdiag(wm) for wm in params["W1"]])
    bd2 = jnp.stack([blockdiag(wm) for wm in params["W2"]])
    bb1 = jnp.stack([tile_vec(b) for b in params["b1"]])         # (L, 1, F*C)
    bb2 = jnp.stack([tile_vec(b) for b in params["b2"]])
    ga = jnp.stack([tile_vec(g) for g in params["ga"]])
    ba = jnp.stack([tile_vec(b) for b in params["ba"]])
    gf = jnp.stack([tile_vec(g) for g in params["gf"]])
    bf = jnp.stack([tile_vec(b) for b in params["bf"]])

    pool = jnp.kron(eyeF, jnp.full((C, C), 1.0 / C, dtype=jnp.float32))

    v_pad = 128                                # lane-dense logits
    wout_t = jnp.zeros((C, v_pad), jnp.float32).at[:, :n_vocab].set(params["Wemb"].T)
    wout = jnp.tile(wout_t, (F_, 1))           # (F*C, 128)

    return dict(emb_tables=params["emb_tables"], pos=params["pos"],
                bagg=bagg, ga=ga, ba=ba, bd1=bd1, bb1=bb1, bd2=bd2, bb2=bb2,
                gf=gf, bf=bf, pool=pool, wout=wout)


# ---------------------------------- wrapper ---------------------------------- #
@functools.partial(jax.jit,
                   static_argnames=("n_features", "n_vocab", "embedding_dim",
                                    "reduce_mean"))
def pallas_forward(X, I, S, packed, *, n_features, n_vocab, embedding_dim,
                   reduce_mean=True):
    N = X.shape[0]
    F_, C = n_features, embedding_dim

    # token_to_embeddings: masked token index -> per-feature embedding + pos emb
    Xm = X * S + (1 - S) * n_vocab                                 # (N, F) ints
    emb = packed["emb_tables"][jnp.arange(F_)[None, :], Xm]        # (N, F, C)
    x0 = (emb + packed["pos"][None]).reshape(N, F_ * C)            # lane-dense

    m = (I + S).astype(jnp.float32)                                # aggregation mask
    if reduce_mean:                                                # AggregatorReduceType.mean
        m = m / m.sum(-1, keepdims=True)
    w = jnp.repeat(m, C, axis=1)                                   # (N, F*C)
    isel = jnp.repeat(I.astype(jnp.float32), C, axis=1)            # (N, F*C)

    vm = pl.BlockSpec(memory_space=pltpu.MemorySpace.VMEM)
    out_pad = pl.pallas_call(
        exp_model_kernel,
        out_shape=jax.ShapeDtypeStruct((N, 128), jnp.float32),
        in_specs=[vm] * 14,
        out_specs=vm,
    )(x0, w, isel,
      packed["bagg"], packed["ga"], packed["ba"],
      packed["bd1"], packed["bb1"], packed["bd2"], packed["bb2"],
      packed["gf"], packed["bf"],
      packed["pool"], packed["wout"])
    return out_pad[:, :n_vocab]


# ------------------------------ pure-JAX reference --------------------------- #
def reference_forward(X, I, S, params, *, n_features, n_vocab, embedding_dim,
                      n_heads, reduce_mean=True):
    """Mirrors ExpModel.forward with MLPAggregator (dropout inactive)."""
    F_, C, H = n_features, embedding_dim, n_heads
    d = C // H
    N = X.shape[0]

    Xm = X * S + (1 - S) * n_vocab
    x = params["emb_tables"][jnp.arange(F_)[None, :], Xm] + params["pos"][None]
    m = (I + S).astype(jnp.float32)

    def ln(v, g, b, eps=1e-5):
        mu = v.mean(-1, keepdims=True)
        var = ((v - mu) ** 2).mean(-1, keepdims=True)
        return (v - mu) / jnp.sqrt(var + eps) * g + b

    n_layers = params["agg"].shape[0]
    for i in range(n_layers):
        xh = x.reshape(N, F_, H, d)
        y = jnp.einsum('hts,ns,nshd->nthd', params["agg"][i], m, xh)
        y = y.reshape(N, F_, C)
        if reduce_mean:
            y = y / m.sum(-1)[:, None, None]
        x = x + ln(y, params["ga"][i], params["ba"][i])
        h = jax.nn.relu(x @ params["W1"][i] + params["b1"][i])
        h = h @ params["W2"][i] + params["b2"][i]
        x = x + ln(h, params["gf"][i], params["bf"][i])

    Fxs = jnp.einsum('nf,nfc->nc', I.astype(jnp.float32), x)
    return Fxs @ params["Wemb"].T


def init_params(key, n_features, n_vocab, embedding_dim, n_heads, n_layers):
    F_, C, V, L = n_features, embedding_dim, n_vocab, n_layers
    ks = jax.random.split(key, 12)
    b_c = 1.0 / math.sqrt(C)
    xav_pos = math.sqrt(2.0 / (F_ + C))
    xav_agg = math.sqrt(2.0 / (F_ + F_))
    return {
        "emb_tables": jax.random.normal(ks[0], (F_, V + 1, C), jnp.float32),
        "pos": xav_pos * jax.random.normal(ks[1], (F_, C), jnp.float32),
        "agg": xav_agg * jax.random.normal(ks[2], (L, n_heads, F_, F_), jnp.float32),
        "W1": jax.random.uniform(ks[3], (L, C, C), jnp.float32, -b_c, b_c),
        "b1": jax.random.uniform(ks[4], (L, C), jnp.float32, -b_c, b_c),
        "W2": jax.random.uniform(ks[5], (L, C, C), jnp.float32, -b_c, b_c),
        "b2": jax.random.uniform(ks[6], (L, C), jnp.float32, -b_c, b_c),
        # LayerNorm params randomized (instead of ones/zeros) for a stronger check
        "ga": 1.0 + 0.1 * jax.random.normal(ks[7], (L, C), jnp.float32),
        "ba": 0.1 * jax.random.normal(ks[8], (L, C), jnp.float32),
        "gf": 1.0 + 0.1 * jax.random.normal(ks[9], (L, C), jnp.float32),
        "bf": 0.1 * jax.random.normal(ks[10], (L, C), jnp.float32),
        "Wemb": jax.random.normal(ks[11], (V, C), jnp.float32),
    }


if __name__ == "__main__":
    # small config consistent with the module: batch=8, n_features=8, n_vocab=4,
    # embedding_dim=32, n_heads=4, n_layers=2, dropout=0 (inactive)
    N, F_, V = 8, 8, 4
    C, H, L = 32, 4, 2

    key = jax.random.PRNGKey(0)
    k_par, k_x, k_i, k_s = jax.random.split(key, 4)

    params = init_params(k_par, F_, V, C, H, L)
    packed = pack_params(params, F_, V, C, H)

    # deterministic example inputs
    X = jax.random.randint(k_x, (N, F_), 0, V, dtype=jnp.int32)
    Ipos = jax.random.randint(k_i, (N,), 0, F_, dtype=jnp.int32)
    I = jax.nn.one_hot(Ipos, F_, dtype=jnp.int32)
    S = jax.random.randint(k_s, (N, F_), 0, 2, dtype=jnp.int32)
    S = S * (1 - I)          # conditioning set excludes the target feature

    logits = jax.block_until_ready(
        pallas_forward(X, I, S, packed, n_features=F_, n_vocab=V,
                       embedding_dim=C, reduce_mean=True))
    ref = jax.block_until_ready(
        reference_forward(X, I, S, params, n_features=F_, n_vocab=V,
                          embedding_dim=C, n_heads=H, reduce_mean=True))

    err = float(jnp.max(jnp.abs(logits - ref)))
    tol = 1e-2 * max(1.0, float(jnp.max(jnp.abs(ref))))
    assert logits.shape == (N, V) and err < tol, f"max abs err {err} (tol {tol})"
    print("KERNEL_OK")
</pallas_src>

<mosaic_0001>
module attributes {stable_mosaic.version = 11 : i64} {
  func.func @exp_model_kernel(%arg0: memref<8x256xf32, #tpu.memory_space<vmem>>, %arg1: memref<8x256xf32, #tpu.memory_space<vmem>>, %arg2: memref<8x256xf32, #tpu.memory_space<vmem>>, %arg3: memref<2x256x256xf32, #tpu.memory_space<vmem>>, %arg4: memref<2x1x256xf32, #tpu.memory_space<vmem>>, %arg5: memref<2x1x256xf32, #tpu.memory_space<vmem>>, %arg6: memref<2x256x256xf32, #tpu.memory_space<vmem>>, %arg7: memref<2x1x256xf32, #tpu.memory_space<vmem>>, %arg8: memref<2x256x256xf32, #tpu.memory_space<vmem>>, %arg9: memref<2x1x256xf32, #tpu.memory_space<vmem>>, %arg10: memref<2x1x256xf32, #tpu.memory_space<vmem>>, %arg11: memref<2x1x256xf32, #tpu.memory_space<vmem>>, %arg12: memref<256x256xf32, #tpu.memory_space<vmem>>, %arg13: memref<256x128xf32, #tpu.memory_space<vmem>>, %arg14: memref<8x128xf32, #tpu.memory_space<vmem>>) attributes {dimension_semantics = [], scalar_prefetch = 0 : i64, scratch_operands = 0 : i64, tpu.core_type = #tpu.core_type<tc>} {
    %c0 = arith.constant 0 : index
    %c0_0 = arith.constant 0 : index
    %0 = vector.load %arg0[%c0, %c0_0] : memref<8x256xf32, #tpu.memory_space<vmem>>, vector<8x256xf32>
    %c0_1 = arith.constant 0 : index
    %c0_2 = arith.constant 0 : index
    %1 = vector.load %arg1[%c0_1, %c0_2] : memref<8x256xf32, #tpu.memory_space<vmem>>, vector<8x256xf32>
    %c0_3 = arith.constant 0 : index
    %c0_4 = arith.constant 0 : index
    %2 = vector.load %arg2[%c0_3, %c0_4] : memref<8x256xf32, #tpu.memory_space<vmem>>, vector<8x256xf32>
    %c0_5 = arith.constant 0 : index
    %c0_6 = arith.constant 0 : index
    %3 = vector.load %arg12[%c0_5, %c0_6] : memref<256x256xf32, #tpu.memory_space<vmem>>, vector<256x256xf32>
    %4 = arith.mulf %0, %1 : vector<8x256xf32>
    %c0_7 = arith.constant 0 : index
    %c0_8 = arith.constant 0 : index
    %c0_9 = arith.constant 0 : index
    %5 = vector.load %arg3[%c0_7, %c0_8, %c0_9] : memref<2x256x256xf32, #tpu.memory_space<vmem>>, vector<1x256x256xf32>
    %6 = vector.shape_cast %5 : vector<1x256x256xf32> to vector<256x256xf32>
    %cst = arith.constant dense<0.000000e+00> : vector<8x256xf32>
    %7 = tpu.matmul %4, %6, %cst {dimension_numbers = #tpu.dot_dimension_numbers<[1], [0], [0], [1], [0, 0, 1, 1], [], []>} : vector<8x256xf32>, vector<256x256xf32>, vector<8x256xf32> -> vector<8x256xf32>
    %c0_10 = arith.constant 0 : index
    %c0_11 = arith.constant 0 : index
    %c0_12 = arith.constant 0 : index
    %8 = vector.load %arg4[%c0_10, %c0_11, %c0_12] : memref<2x1x256xf32, #tpu.memory_space<vmem>>, vector<1x1x256xf32>
    %9 = vector.shape_cast %8 : vector<1x1x256xf32> to vector<1x256xf32>
    %c0_13 = arith.constant 0 : index
    %c0_14 = arith.constant 0 : index
    %c0_15 = arith.constant 0 : index
    %10 = vector.load %arg5[%c0_13, %c0_14, %c0_15] : memref<2x1x256xf32, #tpu.memory_space<vmem>>, vector<1x1x256xf32>
    %11 = vector.shape_cast %10 : vector<1x1x256xf32> to vector<1x256xf32>
    %cst_16 = arith.constant dense<0.000000e+00> : vector<8x256xf32>
    %12 = tpu.matmul %7, %3, %cst_16 {dimension_numbers = #tpu.dot_dimension_numbers<[1], [0], [0], [1], [0, 0, 1, 1], [], []>} : vector<8x256xf32>, vector<256x256xf32>, vector<8x256xf32> -> vector<8x256xf32>
    %13 = arith.subf %7, %12 : vector<8x256xf32>
    %14 = arith.mulf %13, %13 : vector<8x256xf32>
    %cst_17 = arith.constant dense<0.000000e+00> : vector<8x256xf32>
    %15 = tpu.matmul %14, %3, %cst_17 {dimension_numbers = #tpu.dot_dimension_numbers<[1], [0], [0], [1], [0, 0, 1, 1], [], []>} : vector<8x256xf32>, vector<256x256xf32>, vector<8x256xf32> -> vector<8x256xf32>
    %cst_18 = arith.constant 9.99999974E-6 : f32
    %16 = vector.broadcast %cst_18 : f32 to vector<8x256xf32>
    %17 = arith.addf %15, %16 : vector<8x256xf32>
    %18 = math.rsqrt %17 : vector<8x256xf32>
    %19 = arith.mulf %13, %18 : vector<8x256xf32>
    %20 = vector.broadcast %9 : vector<1x256xf32> to vector<8x256xf32>
    %21 = arith.mulf %19, %20 : vector<8x256xf32>
    %22 = vector.broadcast %11 : vector<1x256xf32> to vector<8x256xf32>
    %23 = arith.addf %21, %22 : vector<8x256xf32>
    %24 = arith.addf %0, %23 : vector<8x256xf32>
    %c0_19 = arith.constant 0 : index
    %c0_20 = arith.constant 0 : index
    %c0_21 = arith.constant 0 : index
    %25 = vector.load %arg6[%c0_19, %c0_20, %c0_21] : memref<2x256x256xf32, #tpu.memory_space<vmem>>, vector<1x256x256xf32>
    %26 = vector.shape_cast %25 : vector<1x256x256xf32> to vector<256x256xf32>
    %cst_22 = arith.constant dense<0.000000e+00> : vector<8x256xf32>
    %27 = tpu.matmul %24, %26, %cst_22 {dimension_numbers = #tpu.dot_dimension_numbers<[1], [0], [0], [1], [0, 0, 1, 1], [], []>} : vector<8x256xf32>, vector<256x256xf32>, vector<8x256xf32> -> vector<8x256xf32>
    %c0_23 = arith.constant 0 : index
    %c0_24 = arith.constant 0 : index
    %c0_25 = arith.constant 0 : index
    %28 = vector.load %arg7[%c0_23, %c0_24, %c0_25] : memref<2x1x256xf32, #tpu.memory_space<vmem>>, vector<1x1x256xf32>
    %29 = vector.shape_cast %28 : vector<1x1x256xf32> to vector<1x256xf32>
    %30 = vector.broadcast %29 : vector<1x256xf32> to vector<8x256xf32>
    %31 = arith.addf %27, %30 : vector<8x256xf32>
    %cst_26 = arith.constant 0.000000e+00 : f32
    %32 = vector.broadcast %cst_26 : f32 to vector<8x256xf32>
    %33 = arith.maximumf %31, %32 : vector<8x256xf32>
    %c0_27 = arith.constant 0 : index
    %c0_28 = arith.constant 0 : index
    %c0_29 = arith.constant 0 : index
    %34 = vector.load %arg8[%c0_27, %c0_28, %c0_29] : memref<2x256x256xf32, #tpu.memory_space<vmem>>, vector<1x256x256xf32>
    %35 = vector.shape_cast %34 : vector<1x256x256xf32> to vector<256x256xf32>
    %cst_30 = arith.constant dense<0.000000e+00> : vector<8x256xf32>
    %36 = tpu.matmul %33, %35, %cst_30 {dimension_numbers = #tpu.dot_dimension_numbers<[1], [0], [0], [1], [0, 0, 1, 1], [], []>} : vector<8x256xf32>, vector<256x256xf32>, vector<8x256xf32> -> vector<8x256xf32>
    %c0_31 = arith.constant 0 : index
    %c0_32 = arith.constant 0 : index
    %c0_33 = arith.constant 0 : index
    %37 = vector.load %arg9[%c0_31, %c0_32, %c0_33] : memref<2x1x256xf32, #tpu.memory_space<vmem>>, vector<1x1x256xf32>
    %38 = vector.shape_cast %37 : vector<1x1x256xf32> to vector<1x256xf32>
    %39 = vector.broadcast %38 : vector<1x256xf32> to vector<8x256xf32>
    %40 = arith.addf %36, %39 : vector<8x256xf32>
    %c0_34 = arith.constant 0 : index
    %c0_35 = arith.constant 0 : index
    %c0_36 = arith.constant 0 : index
    %41 = vector.load %arg10[%c0_34, %c0_35, %c0_36] : memref<2x1x256xf32, #tpu.memory_space<vmem>>, vector<1x1x256xf32>
    %42 = vector.shape_cast %41 : vector<1x1x256xf32> to vector<1x256xf32>
    %c0_37 = arith.constant 0 : index
    %c0_38 = arith.constant 0 : index
    %c0_39 = arith.constant 0 : index
    %43 = vector.load %arg11[%c0_37, %c0_38, %c0_39] : memref<2x1x256xf32, #tpu.memory_space<vmem>>, vector<1x1x256xf32>
    %44 = vector.shape_cast %43 : vector<1x1x256xf32> to vector<1x256xf32>
    %cst_40 = arith.constant dense<0.000000e+00> : vector<8x256xf32>
    %45 = tpu.matmul %40, %3, %cst_40 {dimension_numbers = #tpu.dot_dimension_numbers<[1], [0], [0], [1], [0, 0, 1, 1], [], []>} : vector<8x256xf32>, vector<256x256xf32>, vector<8x256xf32> -> vector<8x256xf32>
    %46 = arith.subf %40, %45 : vector<8x256xf32>
    %47 = arith.mulf %46, %46 : vector<8x256xf32>
    %cst_41 = arith.constant dense<0.000000e+00> : vector<8x256xf32>
    %48 = tpu.matmul %47, %3, %cst_41 {dimension_numbers = #tpu.dot_dimension_numbers<[1], [0], [0], [1], [0, 0, 1, 1], [], []>} : vector<8x256xf32>, vector<256x256xf32>, vector<8x256xf32> -> vector<8x256xf32>
    %cst_42 = arith.constant 9.99999974E-6 : f32
    %49 = vector.broadcast %cst_42 : f32 to vector<8x256xf32>
    %50 = arith.addf %48, %49 : vector<8x256xf32>
    %51 = math.rsqrt %50 : vector<8x256xf32>
    %52 = arith.mulf %46, %51 : vector<8x256xf32>
    %53 = vector.broadcast %42 : vector<1x256xf32> to vector<8x256xf32>
    %54 = arith.mulf %52, %53 : vector<8x256xf32>
    %55 = vector.broadcast %44 : vector<1x256xf32> to vector<8x256xf32>
    %56 = arith.addf %54, %55 : vector<8x256xf32>
    %57 = arith.addf %24, %56 : vector<8x256xf32>
    %58 = arith.mulf %57, %1 : vector<8x256xf32>
    %c1 = arith.constant 1 : index
    %c0_43 = arith.constant 0 : index
    %c0_44 = arith.constant 0 : index
    %59 = vector.load %arg3[%c1, %c0_43, %c0_44] : memref<2x256x256xf32, #tpu.memory_space<vmem>>, vector<1x256x256xf32>
    %60 = vector.shape_cast %59 : vector<1x256x256xf32> to vector<256x256xf32>
    %cst_45 = arith.constant dense<0.000000e+00> : vector<8x256xf32>
    %61 = tpu.matmul %58, %60, %cst_45 {dimension_numbers = #tpu.dot_dimension_numbers<[1], [0], [0], [1], [0, 0, 1, 1], [], []>} : vector<8x256xf32>, vector<256x256xf32>, vector<8x256xf32> -> vector<8x256xf32>
    %c1_46 = arith.constant 1 : index
    %c0_47 = arith.constant 0 : index
    %c0_48 = arith.constant 0 : index
    %62 = vector.load %arg4[%c1_46, %c0_47, %c0_48] : memref<2x1x256xf32, #tpu.memory_space<vmem>>, vector<1x1x256xf32>
    %63 = vector.shape_cast %62 : vector<1x1x256xf32> to vector<1x256xf32>
    %c1_49 = arith.constant 1 : index
    %c0_50 = arith.constant 0 : index
    %c0_51 = arith.constant 0 : index
    %64 = vector.load %arg5[%c1_49, %c0_50, %c0_51] : memref<2x1x256xf32, #tpu.memory_space<vmem>>, vector<1x1x256xf32>
    %65 = vector.shape_cast %64 : vector<1x1x256xf32> to vector<1x256xf32>
    %cst_52 = arith.constant dense<0.000000e+00> : vector<8x256xf32>
    %66 = tpu.matmul %61, %3, %cst_52 {dimension_numbers = #tpu.dot_dimension_numbers<[1], [0], [0], [1], [0, 0, 1, 1], [], []>} : vector<8x256xf32>, vector<256x256xf32>, vector<8x256xf32> -> vector<8x256xf32>
    %67 = arith.subf %61, %66 : vector<8x256xf32>
    %68 = arith.mulf %67, %67 : vector<8x256xf32>
    %cst_53 = arith.constant dense<0.000000e+00> : vector<8x256xf32>
    %69 = tpu.matmul %68, %3, %cst_53 {dimension_numbers = #tpu.dot_dimension_numbers<[1], [0], [0], [1], [0, 0, 1, 1], [], []>} : vector<8x256xf32>, vector<256x256xf32>, vector<8x256xf32> -> vector<8x256xf32>
    %cst_54 = arith.constant 9.99999974E-6 : f32
    %70 = vector.broadcast %cst_54 : f32 to vector<8x256xf32>
    %71 = arith.addf %69, %70 : vector<8x256xf32>
    %72 = math.rsqrt %71 : vector<8x256xf32>
    %73 = arith.mulf %67, %72 : vector<8x256xf32>
    %74 = vector.broadcast %63 : vector<1x256xf32> to vector<8x256xf32>
    %75 = arith.mulf %73, %74 : vector<8x256xf32>
    %76 = vector.broadcast %65 : vector<1x256xf32> to vector<8x256xf32>
    %77 = arith.addf %75, %76 : vector<8x256xf32>
    %78 = arith.addf %57, %77 : vector<8x256xf32>
    %c1_55 = arith.constant 1 : index
    %c0_56 = arith.constant 0 : index
    %c0_57 = arith.constant 0 : index
    %79 = vector.load %arg6[%c1_55, %c0_56, %c0_57] : memref<2x256x256xf32, #tpu.memory_space<vmem>>, vector<1x256x256xf32>
    %80 = vector.shape_cast %79 : vector<1x256x256xf32> to vector<256x256xf32>
    %cst_58 = arith.constant dense<0.000000e+00> : vector<8x256xf32>
    %81 = tpu.matmul %78, %80, %cst_58 {dimension_numbers = #tpu.dot_dimension_numbers<[1], [0], [0], [1], [0, 0, 1, 1], [], []>} : vector<8x256xf32>, vector<256x256xf32>, vector<8x256xf32> -> vector<8x256xf32>
    %c1_59 = arith.constant 1 : index
    %c0_60 = arith.constant 0 : index
    %c0_61 = arith.constant 0 : index
    %82 = vector.load %arg7[%c1_59, %c0_60, %c0_61] : memref<2x1x256xf32, #tpu.memory_space<vmem>>, vector<1x1x256xf32>
    %83 = vector.shape_cast %82 : vector<1x1x256xf32> to vector<1x256xf32>
    %84 = vector.broadcast %83 : vector<1x256xf32> to vector<8x256xf32>
    %85 = arith.addf %81, %84 : vector<8x256xf32>
    %cst_62 = arith.constant 0.000000e+00 : f32
    %86 = vector.broadcast %cst_62 : f32 to vector<8x256xf32>
    %87 = arith.maximumf %85, %86 : vector<8x256xf32>
    %c1_63 = arith.constant 1 : index
    %c0_64 = arith.constant 0 : index
    %c0_65 = arith.constant 0 : index
    %88 = vector.load %arg8[%c1_63, %c0_64, %c0_65] : memref<2x256x256xf32, #tpu.memory_space<vmem>>, vector<1x256x256xf32>
    %89 = vector.shape_cast %88 : vector<1x256x256xf32> to vector<256x256xf32>
    %cst_66 = arith.constant dense<0.000000e+00> : vector<8x256xf32>
    %90 = tpu.matmul %87, %89, %cst_66 {dimension_numbers = #tpu.dot_dimension_numbers<[1], [0], [0], [1], [0, 0, 1, 1], [], []>} : vector<8x256xf32>, vector<256x256xf32>, vector<8x256xf32> -> vector<8x256xf32>
    %c1_67 = arith.constant 1 : index
    %c0_68 = arith.constant 0 : index
    %c0_69 = arith.constant 0 : index
    %91 = vector.load %arg9[%c1_67, %c0_68, %c0_69] : memref<2x1x256xf32, #tpu.memory_space<vmem>>, vector<1x1x256xf32>
    %92 = vector.shape_cast %91 : vector<1x1x256xf32> to vector<1x256xf32>
    %93 = vector.broadcast %92 : vector<1x256xf32> to vector<8x256xf32>
    %94 = arith.addf %90, %93 : vector<8x256xf32>
    %c1_70 = arith.constant 1 : index
    %c0_71 = arith.constant 0 : index
    %c0_72 = arith.constant 0 : index
    %95 = vector.load %arg10[%c1_70, %c0_71, %c0_72] : memref<2x1x256xf32, #tpu.memory_space<vmem>>, vector<1x1x256xf32>
    %96 = vector.shape_cast %95 : vector<1x1x256xf32> to vector<1x256xf32>
    %c1_73 = arith.constant 1 : index
    %c0_74 = arith.constant 0 : index
    %c0_75 = arith.constant 0 : index
    %97 = vector.load %arg11[%c1_73, %c0_74, %c0_75] : memref<2x1x256xf32, #tpu.memory_space<vmem>>, vector<1x1x256xf32>
    %98 = vector.shape_cast %97 : vector<1x1x256xf32> to vector<1x256xf32>
    %cst_76 = arith.constant dense<0.000000e+00> : vector<8x256xf32>
    %99 = tpu.matmul %94, %3, %cst_76 {dimension_numbers = #tpu.dot_dimension_numbers<[1], [0], [0], [1], [0, 0, 1, 1], [], []>} : vector<8x256xf32>, vector<256x256xf32>, vector<8x256xf32> -> vector<8x256xf32>
    %100 = arith.subf %94, %99 : vector<8x256xf32>
    %101 = arith.mulf %100, %100 : vector<8x256xf32>
    %cst_77 = arith.constant dense<0.000000e+00> : vector<8x256xf32>
    %102 = tpu.matmul %101, %3, %cst_77 {dimension_numbers = #tpu.dot_dimension_numbers<[1], [0], [0], [1], [0, 0, 1, 1], [], []>} : vector<8x256xf32>, vector<256x256xf32>, vector<8x256xf32> -> vector<8x256xf32>
    %cst_78 = arith.constant 9.99999974E-6 : f32
    %103 = vector.broadcast %cst_78 : f32 to vector<8x256xf32>
    %104 = arith.addf %102, %103 : vector<8x256xf32>
    %105 = math.rsqrt %104 : vector<8x256xf32>
    %106 = arith.mulf %100, %105 : vector<8x256xf32>
    %107 = vector.broadcast %96 : vector<1x256xf32> to vector<8x256xf32>
    %108 = arith.mulf %106, %107 : vector<8x256xf32>
    %109 = vector.broadcast %98 : vector<1x256xf32> to vector<8x256xf32>
    %110 = arith.addf %108, %109 : vector<8x256xf32>
    %111 = arith.addf %78, %110 : vector<8x256xf32>
    %112 = arith.mulf %111, %2 : vector<8x256xf32>
    %c0_79 = arith.constant 0 : index
    %c0_80 = arith.constant 0 : index
    %113 = vector.load %arg13[%c0_79, %c0_80] : memref<256x128xf32, #tpu.memory_space<vmem>>, vector<256x128xf32>
    %cst_81 = arith.constant dense<0.000000e+00> : vector<8x128xf32>
    %114 = tpu.matmul %112, %113, %cst_81 {dimension_numbers = #tpu.dot_dimension_numbers<[1], [0], [0], [1], [0, 0, 1, 1], [], []>} : vector<8x256xf32>, vector<256x128xf32>, vector<8x128xf32> -> vector<8x128xf32>
    %c0_82 = arith.constant 0 : index
    %c0_83 = arith.constant 0 : index
    %115 = vector.load %arg14[%c0_82, %c0_83] : memref<8x128xf32, #tpu.memory_space<vmem>>, vector<8x128xf32>
    tpu.vector_store %arg14[%c0_82, %c0_83], %114 {strides = array<i32>} : memref<8x128xf32, #tpu.memory_space<vmem>>, vector<8x128xf32>,
    return
  }
}

</mosaic_0001>

<llo_original>
// kernel: pallas_forward.1
$region0: #{pallas_forward.1}
  #allocation0 [shape = 'u32[]', space=smem, size = 0x4, offset = 0x4, fixed_abs, tag = 'smem constant byte address 0x4 - core index']
  #allocation1 [shape = 'u32[144,128]{1,0:T(1,128)}', space=vmem, size = 0x12000, scoped, tag = 'internal scratch']
  %s0 = inlined_call_operand.vmem [shape: f32[8,256], index: 0, kind: input, shape index: {}]
  %s1 = inlined_call_operand.vmem [shape: f32[8,256], index: 1, kind: input, shape index: {}]
  %s2 = inlined_call_operand.vmem [shape: f32[8,256], index: 2, kind: input, shape index: {}]
  %s3 = inlined_call_operand.vmem [shape: f32[2,256,256], index: 3, kind: input, shape index: {}]
  %s4 = inlined_call_operand.vmem [shape: f32[2,1,256], index: 4, kind: input, shape index: {}]
  %s5 = inlined_call_operand.vmem [shape: f32[2,1,256], index: 5, kind: input, shape index: {}]
  %s6 = inlined_call_operand.hbm [shape: f32[2,256,256], index: 6, kind: input, shape index: {}]
  %s7 = inlined_call_operand.vmem [shape: f32[2,1,256], index: 7, kind: input, shape index: {}]
  %s8 = inlined_call_operand.hbm [shape: f32[2,256,256], index: 8, kind: input, shape index: {}]
  %s9 = inlined_call_operand.vmem [shape: f32[2,1,256], index: 9, kind: input, shape index: {}]
  %s10 = inlined_call_operand.vmem [shape: f32[2,1,256], index: 10, kind: input, shape index: {}]
  %s11 = inlined_call_operand.vmem [shape: f32[2,1,256], index: 11, kind: input, shape index: {}]
  %s12 = inlined_call_operand.hbm [shape: f32[256,256], index: 12, kind: input, shape index: {}]
  %s13 = inlined_call_operand.hbm [shape: f32[256,128], index: 13, kind: input, shape index: {}]
  %s14 = inlined_call_operand.vmem [shape: f32[8,128], index: 14, kind: output, shape index: {}]
  %s15 = sld [smem:[#allocation0]]
  $region82: #{pallas_forward.1} parent=0
    _
  %s17 = ssub.s32 1, %s15
  %s18 = scalar_select 0, %s17, %s15
  $region1: #{pallas_forward.1} parent=0
    #allocation2 [shape = 'u8[524288]{0}', space=vmem, size = 0x80000, scoped, tag = 'input window, operand 6, single buffered']
    #allocation3 [shape = 's32[1]{0}', space=sflag, size = 0x4, scoped, tag = 'scoped memory for pallas_forward.1']
    #allocation4 [shape = 'u8[524288]{0}', space=vmem, size = 0x80000, scoped, tag = 'input window, operand 8, single buffered']
    #allocation5 [shape = 's32[1]{0}', space=sflag, size = 0x4, scoped, tag = 'scoped memory for pallas_forward.1']
    #allocation6 [shape = 'u8[262144]{0}', space=vmem, size = 0x40000, scoped, tag = 'input window, operand 12, single buffered']
    #allocation7 [shape = 'u8[131072]{0}', space=vmem, size = 0x20000, scoped, tag = 'input window, operand 13, single buffered']
    #allocation8 [shape = 's32[1]{0}', space=sflag, size = 0x4, scoped, tag = 'scoped memory for pallas_forward.1']
    %19 = vsyncpa [#allocation3], 0
    %20 = vsyncpa [#allocation5], 0
    %21 = vsyncpa [#allocation8], 0
    // Predicated region
    $region2: #{pallas_forward.1} parent=1 // pred_check
      _
    $region3: #{pallas_forward.1} parent=1 // pred_check_branch
      %23 = sbr.rel (0) target = $region5
    $region4: #{pallas_forward.1} parent=1 // pred_region
      _
    $region5: #{pallas_forward.1} parent=1 // pred_fallthru
      _
    // Predicated region
    $region6: #{pallas_forward.1} parent=1 // pred_check
      _
    $region7: #{pallas_forward.1} parent=1 // pred_check_branch
      %25 = sbr.rel (0) target = $region9
    $region8: #{pallas_forward.1} parent=1 // pred_region
      _
    $region9: #{pallas_forward.1} parent=1 // pred_fallthru
      _
    // Predicated region
    $region10: #{pallas_forward.1} parent=1 // pred_check
      _
    $region11: #{pallas_forward.1} parent=1 // pred_check_branch
      %27 = sbr.rel (0) target = $region13
    $region12: #{pallas_forward.1} parent=1 // pred_region
      _
    $region13: #{pallas_forward.1} parent=1 // pred_fallthru
      _
    // Predicated region
    $region14: #{pallas_forward.1} parent=1 // pred_check
      _
    $region15: #{pallas_forward.1} parent=1 // pred_check_branch
      %29 = sbr.rel (0) target = $region17
    $region16: #{pallas_forward.1} parent=1 // pred_region
      _
    $region17: #{pallas_forward.1} parent=1 // pred_fallthru
      _
    // Predicated region
    $region18: #{pallas_forward.1} parent=1 // pred_check
      _
    $region19: #{pallas_forward.1} parent=1 // pred_check_branch
      %31 = sbr.rel (0) target = $region21
    $region20: #{pallas_forward.1} parent=1 // pred_region
      _
    $region21: #{pallas_forward.1} parent=1 // pred_fallthru
      _
    // Predicated region
    $region22: #{pallas_forward.1} parent=1 // pred_check
      _
    $region23: #{pallas_forward.1} parent=1 // pred_check_branch
      %33 = sbr.rel (0) target = $region25
    $region24: #{pallas_forward.1} parent=1 // pred_region
      _
    $region25: #{pallas_forward.1} parent=1 // pred_fallthru
      _
    // Predicated region
    $region26: #{pallas_forward.1} parent=1 // pred_check
      _
    $region27: #{pallas_forward.1} parent=1 // pred_check_branch
      %35 = sbr.rel (0) target = $region29
    $region28: #{pallas_forward.1} parent=1 // pred_region
      %s37 = ssub.s32 16384, 16384
      %38 = vsyncadd [#allocation3], %s37
      %s39 = sshll.u32 [#allocation2], 4
      %s40 = int_to_ptr.vmem [resolvable:$true] %s39
      %45 = dma.hbm_to_vmem [thread:$0]  %s6, 16384, %s40, [#allocation3], 256, 256, 16
    $region29: #{pallas_forward.1} parent=1 // pred_fallthru
      _
    // Predicated region
    $region30: #{pallas_forward.1} parent=1 // pred_check
      _
    $region31: #{pallas_forward.1} parent=1 // pred_check_branch
      %47 = sbr.rel (0) target = $region33
    $region32: #{pallas_forward.1} parent=1 // pred_region
      _
    $region33: #{pallas_forward.1} parent=1 // pred_fallthru
      _
    // Predicated region
    $region34: #{pallas_forward.1} parent=1 // pred_check
      _
    $region35: #{pallas_forward.1} parent=1 // pred_check_branch
      %49 = sbr.rel (0) target = $region37
    $region36: #{pallas_forward.1} parent=1 // pred_region
      %s51 = ssub.s32 16384, 16384
      %52 = vsyncadd [#allocation5], %s51
      %s53 = sshll.u32 [#allocation4], 4
      %s54 = int_to_ptr.vmem [resolvable:$true] %s53
      %59 = dma.hbm_to_vmem [thread:$0]  %s8, 16384, %s54, [#allocation5], 256, 256, 16
    $region37: #{pallas_forward.1} parent=1 // pred_fallthru
      _
    // Predicated region
    $region38: #{pallas_forward.1} parent=1 // pred_check
      _
    $region39: #{pallas_forward.1} parent=1 // pred_check_branch
      %61 = sbr.rel (0) target = $region41
    $region40: #{pallas_forward.1} parent=1 // pred_region
      _
    $region41: #{pallas_forward.1} parent=1 // pred_fallthru
      _
    // Predicated region
    $region42: #{pallas_forward.1} parent=1 // pred_check
      _
    $region43: #{pallas_forward.1} parent=1 // pred_check_branch
      %63 = sbr.rel (0) target = $region45
    $region44: #{pallas_forward.1} parent=1 // pred_region
      _
    $region45: #{pallas_forward.1} parent=1 // pred_fallthru
      _
    // Predicated region
    $region46: #{pallas_forward.1} parent=1 // pred_check
      _
    $region47: #{pallas_forward.1} parent=1 // pred_check_branch
      %65 = sbr.rel (0) target = $region49
    $region48: #{pallas_forward.1} parent=1 // pred_region
      _
    $region49: #{pallas_forward.1} parent=1 // pred_fallthru
      _
    // Predicated region
    $region50: #{pallas_forward.1} parent=1 // pred_check
      _
    $region51: #{pallas_forward.1} parent=1 // pred_check_branch
      %67 = sbr.rel (0) target = $region53
    $region52: #{pallas_forward.1} parent=1 // pred_region
      %s69 = ssub.s32 8192, 8192
      %70 = vsyncadd [#allocation5], %s69
      %s71 = sshll.u32 [#allocation6], 4
      %s72 = int_to_ptr.vmem [resolvable:$true] %s71
      %77 = dma.hbm_to_vmem [thread:$0]  %s12, 8192, %s72, [#allocation5], 256, 256, 16
    $region53: #{pallas_forward.1} parent=1 // pred_fallthru
      _
    // Predicated region
    $region54: #{pallas_forward.1} parent=1 // pred_check
      _
    $region55: #{pallas_forward.1} parent=1 // pred_check_branch
      %79 = sbr.rel (0) target = $region57
    $region56: #{pallas_forward.1} parent=1 // pred_region
      %s81 = ssub.s32 4096, 4096
      %82 = vsyncadd [#allocation8], %s81
      %s83 = sshll.u32 [#allocation7], 4
      %s84 = int_to_ptr.vmem [resolvable:$true] %s83
      %89 = dma.hbm_to_vmem [thread:$0]  %s13, 4096, %s84, [#allocation8], 128, 128, 8
    $region57: #{pallas_forward.1} parent=1 // pred_fallthru
      _
    // Predicated region
    $region58: #{pallas_forward.1} parent=1 // pred_check
      _
    $region59: #{pallas_forward.1} parent=1 // pred_check_branch
      %91 = sbr.rel (0) target = $region61
    $region60: #{pallas_forward.1} parent=1 // pred_region
      %92 = dma.done [#allocation3], 16384
    $region61: #{pallas_forward.1} parent=1 // pred_fallthru
      _
    // Predicated region
    $region62: #{pallas_forward.1} parent=1 // pred_check
      _
    $region63: #{pallas_forward.1} parent=1 // pred_check_branch
      %94 = sbr.rel (0) target = $region65
    $region64: #{pallas_forward.1} parent=1 // pred_region
      %95 = dma.done [#allocation5], 16384
    $region65: #{pallas_forward.1} parent=1 // pred_fallthru
      _
    // Predicated region
    $region66: #{pallas_forward.1} parent=1 // pred_check
      _
    $region67: #{pallas_forward.1} parent=1 // pred_check_branch
      %97 = sbr.rel (0) target = $region69
    $region68: #{pallas_forward.1} parent=1 // pred_region
      %98 = dma.done [#allocation5], 8192
    $region69: #{pallas_forward.1} parent=1 // pred_fallthru
      _
    // Predicated region
    $region70: #{pallas_forward.1} parent=1 // pred_check
      _
    $region71: #{pallas_forward.1} parent=1 // pred_check_branch
      %100 = sbr.rel (0) target = $region73
    $region72: #{pallas_forward.1} parent=1 // pred_region
      %101 = dma.done [#allocation8], 4096
    $region73: #{pallas_forward.1} parent=1 // pred_fallthru
      _
    %v102 = vld [vmem:[%s0] sm:$0xff]
    %v103 = vld [vmem:[%s0 + $0x8] sm:$0xff]
    %v104 = vld [vmem:[%s1] sm:$0xff]
    %v105 = vld [vmem:[%s1 + $0x8] sm:$0xff]
    %v106 = vld [vmem:[%s2] sm:$0xff]
    %v107 = vld [vmem:[%s2 + $0x8] sm:$0xff]
    %v108 = vld [vmem:[#allocation6] sm:$0xff]
    %v109 = vld [vmem:[#allocation6 + $0x8] sm:$0xff]
    %v110 = vld [vmem:[#allocation6 + $0x10] sm:$0xff]
    %v111 = vld [vmem:[#allocation6 + $0x18] sm:$0xff]
    %v112 = vld [vmem:[#allocation6 + $0x20] sm:$0xff]
    %v113 = vld [vmem:[#allocation6 + $0x28] sm:$0xff]
    %v114 = vld [vmem:[#allocation6 + $0x30] sm:$0xff]
    %v115 = vld [vmem:[#allocation6 + $0x38] sm:$0xff]
    %v116 = vld [vmem:[#allocation6 + $0x40] sm:$0xff]
    %v117 = vld [vmem:[#allocation6 + $0x48] sm:$0xff]
    %v118 = vld [vmem:[#allocation6 + $0x50] sm:$0xff]
    %v119 = vld [vmem:[#allocation6 + $0x58] sm:$0xff]
    %v120 = vld [vmem:[#allocation6 + $0x60] sm:$0xff]
    %v121 = vld [vmem:[#allocation6 + $0x68] sm:$0xff]
    %v122 = vld [vmem:[#allocation6 + $0x70] sm:$0xff]
    %v123 = vld [vmem:[#allocation6 + $0x78] sm:$0xff]
    %v124 = vld [vmem:[#allocation6 + $0x80] sm:$0xff]
    %v125 = vld [vmem:[#allocation6 + $0x88] sm:$0xff]
    %v126 = vld [vmem:[#allocation6 + $0x90] sm:$0xff]
    %v127 = vld [vmem:[#allocation6 + $0x98] sm:$0xff]
    %v128 = vld [vmem:[#allocation6 + $0xa0] sm:$0xff]
    %v129 = vld [vmem:[#allocation6 + $0xa8] sm:$0xff]
    %v130 = vld [vmem:[#allocation6 + $0xb0] sm:$0xff]
    %v131 = vld [vmem:[#allocation6 + $0xb8] sm:$0xff]
    %v132 = vld [vmem:[#allocation6 + $0xc0] sm:$0xff]
    %v133 = vld [vmem:[#allocation6 + $0xc8] sm:$0xff]
    %v134 = vld [vmem:[#allocation6 + $0xd0] sm:$0xff]
    %v135 = vld [vmem:[#allocation6 + $0xd8] sm:$0xff]
    %v136 = vld [vmem:[#allocation6 + $0xe0] sm:$0xff]
    %v137 = vld [vmem:[#allocation6 + $0xe8] sm:$0xff]
    %v138 = vld [vmem:[#allocation6 + $0xf0] sm:$0xff]
    %v139 = vld [vmem:[#allocation6 + $0xf8] sm:$0xff]
    %v140 = vld [vmem:[#allocation6 + $0x100] sm:$0xff]
    %v141 = vld [vmem:[#allocation6 + $0x108] sm:$0xff]
    %v142 = vld [vmem:[#allocation6 + $0x110] sm:$0xff]
    %v143 = vld [vmem:[#allocation6 + $0x118] sm:$0xff]
    %v144 = vld [vmem:[#allocation6 + $0x120] sm:$0xff]
    %v145 = vld [vmem:[#allocation6 + $0x128] sm:$0xff]
    %v146 = vld [vmem:[#allocation6 + $0x130] sm:$0xff]
    %v147 = vld [vmem:[#allocation6 + $0x138] sm:$0xff]
    %v148 = vld [vmem:[#allocation6 + $0x140] sm:$0xff]
    %v149 = vld [vmem:[#allocation6 + $0x148] sm:$0xff]
    %v150 = vld [vmem:[#allocation6 + $0x150] sm:$0xff]
    %v151 = vld [vmem:[#allocation6 + $0x158] sm:$0xff]
    %v152 = vld [vmem:[#allocation6 + $0x160] sm:$0xff]
    %v153 = vld [vmem:[#allocation6 + $0x168] sm:$0xff]
    %v154 = vld [vmem:[#allocation6 + $0x170] sm:$0xff]
    %v155 = vld [vmem:[#allocation6 + $0x178] sm:$0xff]
    %v156 = vld [vmem:[#allocation6 + $0x180] sm:$0xff]
    %v157 = vld [vmem:[#allocation6 + $0x188] sm:$0xff]
    %v158 = vld [vmem:[#allocation6 + $0x190] sm:$0xff]
    %v159 = vld [vmem:[#allocation6 + $0x198] sm:$0xff]
    %v160 = vld [vmem:[#allocation6 + $0x1a0] sm:$0xff]
    %v161 = vld [vmem:[#allocation6 + $0x1a8] sm:$0xff]
    %v162 = vld [vmem:[#allocation6 + $0x1b0] sm:$0xff]
    %v163 = vld [vmem:[#allocation6 + $0x1b8] sm:$0xff]
    %v164 = vld [vmem:[#allocation6 + $0x1c0] sm:$0xff]
    %v165 = vld [vmem:[#allocation6 + $0x1c8] sm:$0xff]
    %v166 = vld [vmem:[#allocation6 + $0x1d0] sm:$0xff]
    %v167 = vld [vmem:[#allocation6 + $0x1d8] sm:$0xff]
    %v168 = vld [vmem:[#allocation6 + $0x1e0] sm:$0xff]
    %v169 = vld [vmem:[#allocation6 + $0x1e8] sm:$0xff]
    %v170 = vld [vmem:[#allocation6 + $0x1f0] sm:$0xff]
    %v171 = vld [vmem:[#allocation6 + $0x1f8] sm:$0xff]
    %v172 = vmul.f32 %v102, %v104
    %v173 = vmul.f32 %v103, %v105
    %v174 = vld [vmem:[%s3] sm:$0xff]
    %v175 = vld [vmem:[%s3 + $0x8] sm:$0xff]
    %v176 = vld [vmem:[%s3 + $0x10] sm:$0xff]
    %v177 = vld [vmem:[%s3 + $0x18] sm:$0xff]
    %v178 = vld [vmem:[%s3 + $0x20] sm:$0xff]
    %v179 = vld [vmem:[%s3 + $0x28] sm:$0xff]
    %v180 = vld [vmem:[%s3 + $0x30] sm:$0xff]
    %v181 = vld [vmem:[%s3 + $0x38] sm:$0xff]
    %v182 = vld [vmem:[%s3 + $0x40] sm:$0xff]
    %v183 = vld [vmem:[%s3 + $0x48] sm:$0xff]
    %v184 = vld [vmem:[%s3 + $0x50] sm:$0xff]
    %v185 = vld [vmem:[%s3 + $0x58] sm:$0xff]
    %v186 = vld [vmem:[%s3 + $0x60] sm:$0xff]
    %v187 = vld [vmem:[%s3 + $0x68] sm:$0xff]
    %v188 = vld [vmem:[%s3 + $0x70] sm:$0xff]
    %v189 = vld [vmem:[%s3 + $0x78] sm:$0xff]
    %v190 = vld [vmem:[%s3 + $0x80] sm:$0xff]
    %v191 = vld [vmem:[%s3 + $0x88] sm:$0xff]
    %v192 = vld [vmem:[%s3 + $0x90] sm:$0xff]
    %v193 = vld [vmem:[%s3 + $0x98] sm:$0xff]
    %v194 = vld [vmem:[%s3 + $0xa0] sm:$0xff]
    %v195 = vld [vmem:[%s3 + $0xa8] sm:$0xff]
    %v196 = vld [vmem:[%s3 + $0xb0] sm:$0xff]
    %v197 = vld [vmem:[%s3 + $0xb8] sm:$0xff]
    %v198 = vld [vmem:[%s3 + $0xc0] sm:$0xff]
    %v199 = vld [vmem:[%s3 + $0xc8] sm:$0xff]
    %v200 = vld [vmem:[%s3 + $0xd0] sm:$0xff]
    %v201 = vld [vmem:[%s3 + $0xd8] sm:$0xff]
    %v202 = vld [vmem:[%s3 + $0xe0] sm:$0xff]
    %v203 = vld [vmem:[%s3 + $0xe8] sm:$0xff]
    %v204 = vld [vmem:[%s3 + $0xf0] sm:$0xff]
    %v205 = vld [vmem:[%s3 + $0xf8] sm:$0xff]
    %v206 = vld [vmem:[%s3 + $0x100] sm:$0xff]
    %v207 = vld [vmem:[%s3 + $0x108] sm:$0xff]
    %v208 = vld [vmem:[%s3 + $0x110] sm:$0xff]
    %v209 = vld [vmem:[%s3 + $0x118] sm:$0xff]
    %v210 = vld [vmem:[%s3 + $0x120] sm:$0xff]
    %v211 = vld [vmem:[%s3 + $0x128] sm:$0xff]
    %v212 = vld [vmem:[%s3 + $0x130] sm:$0xff]
    %v213 = vld [vmem:[%s3 + $0x138] sm:$0xff]
    %v214 = vld [vmem:[%s3 + $0x140] sm:$0xff]
    %v215 = vld [vmem:[%s3 + $0x148] sm:$0xff]
    %v216 = vld [vmem:[%s3 + $0x150] sm:$0xff]
    %v217 = vld [vmem:[%s3 + $0x158] sm:$0xff]
    %v218 = vld [vmem:[%s3 + $0x160] sm:$0xff]
    %v219 = vld [vmem:[%s3 + $0x168] sm:$0xff]
    %v220 = vld [vmem:[%s3 + $0x170] sm:$0xff]
    %v221 = vld [vmem:[%s3 + $0x178] sm:$0xff]
    %v222 = vld [vmem:[%s3 + $0x180] sm:$0xff]
    %v223 = vld [vmem:[%s3 + $0x188] sm:$0xff]
    %v224 = vld [vmem:[%s3 + $0x190] sm:$0xff]
    %v225 = vld [vmem:[%s3 + $0x198] sm:$0xff]
    %v226 = vld [vmem:[%s3 + $0x1a0] sm:$0xff]
    %v227 = vld [vmem:[%s3 + $0x1a8] sm:$0xff]
    %v228 = vld [vmem:[%s3 + $0x1b0] sm:$0xff]
    %v229 = vld [vmem:[%s3 + $0x1b8] sm:$0xff]
    %v230 = vld [vmem:[%s3 + $0x1c0] sm:$0xff]
    %v231 = vld [vmem:[%s3 + $0x1c8] sm:$0xff]
    %v232 = vld [vmem:[%s3 + $0x1d0] sm:$0xff]
    %v233 = vld [vmem:[%s3 + $0x1d8] sm:$0xff]
    %v234 = vld [vmem:[%s3 + $0x1e0] sm:$0xff]
    %v235 = vld [vmem:[%s3 + $0x1e8] sm:$0xff]
    %v236 = vld [vmem:[%s3 + $0x1f0] sm:$0xff]
    %v237 = vld [vmem:[%s3 + $0x1f8] sm:$0xff]
    %238 = vmatprep.subr.mxu0 %v175
    %239 = vmatpush1.msra.mxu0 %v174
    %240 = vmatprep.subr.mxu0 %v177
    %241 = vmatpush1.msra.mxu0 %v176
    %242 = vmatprep.subr.mxu0 %v179
    %243 = vmatpush1.msra.mxu0 %v178
    %244 = vmatprep.subr.mxu0 %v181
    %245 = vmatpush1.msra.mxu0 %v180
    %246 = vmatprep.subr.mxu0 %v183
    %247 = vmatpush1.msra.mxu0 %v182
    %248 = vmatprep.subr.mxu0 %v185
    %249 = vmatpush1.msra.mxu0 %v184
    %250 = vmatprep.subr.mxu0 %v187
    %251 = vmatpush1.msra.mxu0 %v186
    %252 = vmatprep.subr.mxu0 %v189
    %253 = vmatpush1.msra.mxu0 %v188
    %254 = vmatprep.subr.mxu0 %v191
    %255 = vmatpush1.msra.mxu0 %v190
    %256 = vmatprep.subr.mxu0 %v193
    %257 = vmatpush1.msra.mxu0 %v192
    %258 = vmatprep.subr.mxu0 %v195
    %259 = vmatpush1.msra.mxu0 %v194
    %260 = vmatprep.subr.mxu0 %v197
    %261 = vmatpush1.msra.mxu0 %v196
    %262 = vmatprep.subr.mxu0 %v199
    %263 = vmatpush1.msra.mxu0 %v198
    %264 = vmatprep.subr.mxu0 %v201
    %265 = vmatpush1.msra.mxu0 %v200
    %266 = vmatprep.subr.mxu0 %v203
    %267 = vmatpush1.msra.mxu0 %v202
    %268 = vmatprep.subr.mxu0 %v205
    %269 = vmatpush1.msra.mxu0 %v204
    %270 = vmatprep.subr.mxu0 %v207
    %271 = vmatpush1.msra.mxu0 %v206
    %272 = vmatprep.subr.mxu0 %v209
    %273 = vmatpush1.msra.mxu0 %v208
    %274 = vmatprep.subr.mxu0 %v211
    %275 = vmatpush1.msra.mxu0 %v210
    %276 = vmatprep.subr.mxu0 %v213
    %277 = vmatpush1.msra.mxu0 %v212
    %278 = vmatprep.subr.mxu0 %v215
    %279 = vmatpush1.msra.mxu0 %v214
    %280 = vmatprep.subr.mxu0 %v217
    %281 = vmatpush1.msra.mxu0 %v216
    %282 = vmatprep.subr.mxu0 %v219
    %283 = vmatpush1.msra.mxu0 %v218
    %284 = vmatprep.subr.mxu0 %v221
    %285 = vmatpush1.msra.mxu0 %v220
    %286 = vmatprep.subr.mxu0 %v223
    %287 = vmatpush1.msra.mxu0 %v222
    %288 = vmatprep.subr.mxu0 %v225
    %289 = vmatpush1.msra.mxu0 %v224
    %290 = vmatprep.subr.mxu0 %v227
    %291 = vmatpush1.msra.mxu0 %v226
    %292 = vmatprep.subr.mxu0 %v229
    %293 = vmatpush1.msra.mxu0 %v228
    %294 = vmatprep.subr.mxu0 %v231
    %295 = vmatpush1.msra.mxu0 %v230
    %296 = vmatprep.subr.mxu0 %v233
    %297 = vmatpush1.msra.mxu0 %v232
    %298 = vmatprep.subr.mxu0 %v235
    %299 = vmatpush1.msra.mxu0 %v234
    %300 = vmatprep.subr.mxu0 %v237
    %301 = vmatpush1.msra.mxu0 %v236
    %302 = vmatprep.mubr.f32.mxu0 %v173
    %303 = vmatmul.mubr.f32.gmra.mrb[0].mxu0 %v172
    %v304 = vpop.f32.mrb[0].mxu0
    %v305 = vadd.f32 0.0, %v304
    %v306 = vpop.f32.mrb[0].mxu0
    %v307 = vadd.f32 0.0, %v306
    %308 = vdwg.mxu0
    %v309 = vld [vmem:[%s4] sm:$0x3]
    %v310 = vld [vmem:[%s5] sm:$0x3]
    %311 = vmatprep.subr.mxu0 %v109
    %312 = vmatpush1.msra.mxu0 %v108
    %313 = vmatprep.subr.mxu0 %v111
    %314 = vmatpush1.msra.mxu0 %v110
    %315 = vmatprep.subr.mxu0 %v113
    %316 = vmatpush1.msra.mxu0 %v112
    %317 = vmatprep.subr.mxu0 %v115
    %318 = vmatpush1.msra.mxu0 %v114
    %319 = vmatprep.subr.mxu0 %v117
    %320 = vmatpush1.msra.mxu0 %v116
    %321 = vmatprep.subr.mxu0 %v119
    %322 = vmatpush1.msra.mxu0 %v118
    %323 = vmatprep.subr.mxu0 %v121
    %324 = vmatpush1.msra.mxu0 %v120
    %325 = vmatprep.subr.mxu0 %v123
    %326 = vmatpush1.msra.mxu0 %v122
    %327 = vmatprep.subr.mxu0 %v125
    %328 = vmatpush1.msra.mxu0 %v124
    %329 = vmatprep.subr.mxu0 %v127
    %330 = vmatpush1.msra.mxu0 %v126
    %331 = vmatprep.subr.mxu0 %v129
    %332 = vmatpush1.msra.mxu0 %v128
    %333 = vmatprep.subr.mxu0 %v131
    %334 = vmatpush1.msra.mxu0 %v130
    %335 = vmatprep.subr.mxu0 %v133
    %336 = vmatpush1.msra.mxu0 %v132
    %337 = vmatprep.subr.mxu0 %v135
    %338 = vmatpush1.msra.mxu0 %v134
    %339 = vmatprep.subr.mxu0 %v137
    %340 = vmatpush1.msra.mxu0 %v136
    %341 = vmatprep.subr.mxu0 %v139
    %342 = vmatpush1.msra.mxu0 %v138
    %343 = vmatprep.subr.mxu0 %v141
    %344 = vmatpush1.msra.mxu0 %v140
    %345 = vmatprep.subr.mxu0 %v143
    %346 = vmatpush1.msra.mxu0 %v142
    %347 = vmatprep.subr.mxu0 %v145
    %348 = vmatpush1.msra.mxu0 %v144
    %349 = vmatprep.subr.mxu0 %v147
    %350 = vmatpush1.msra.mxu0 %v146
    %351 = vmatprep.subr.mxu0 %v149
    %352 = vmatpush1.msra.mxu0 %v148
    %353 = vmatprep.subr.mxu0 %v151
    %354 = vmatpush1.msra.mxu0 %v150
    %355 = vmatprep.subr.mxu0 %v153
    %356 = vmatpush1.msra.mxu0 %v152
    %357 = vmatprep.subr.mxu0 %v155
    %358 = vmatpush1.msra.mxu0 %v154
    %359 = vmatprep.subr.mxu0 %v157
    %360 = vmatpush1.msra.mxu0 %v156
    %361 = vmatprep.subr.mxu0 %v159
    %362 = vmatpush1.msra.mxu0 %v158
    %363 = vmatprep.subr.mxu0 %v161
    %364 = vmatpush1.msra.mxu0 %v160
    %365 = vmatprep.subr.mxu0 %v163
    %366 = vmatpush1.msra.mxu0 %v162
    %367 = vmatprep.subr.mxu0 %v165
    %368 = vmatpush1.msra.mxu0 %v164
    %369 = vmatprep.subr.mxu0 %v167
    %370 = vmatpush1.msra.mxu0 %v166
    %371 = vmatprep.subr.mxu0 %v169
    %372 = vmatpush1.msra.mxu0 %v168
    %373 = vmatprep.subr.mxu0 %v171
    %374 = vmatpush1.msra.mxu0 %v170
    %375 = vmatprep.mubr.f32.mxu0 %v307
    %376 = vmatmul.mubr.f32.gmra.mrb[0].mxu0 %v305
    %v377 = vpop.f32.mrb[0].mxu0
    %v378 = vadd.f32 0.0, %v377
    %v379 = vpop.f32.mrb[0].mxu0
    %v380 = vadd.f32 0.0, %v379
    %381 = vdwg.mxu0
    %v382 = vsub.f32 %v305, %v378
    %v383 = vsub.f32 %v307, %v380
    %v384 = vmul.f32 %v382, %v382
    %v385 = vmul.f32 %v383, %v383
    %386 = vmatprep.subr.mxu0 %v109
    %387 = vmatpush1.msra.mxu0 %v108
    %388 = vmatprep.subr.mxu0 %v111
    %389 = vmatpush1.msra.mxu0 %v110
    %390 = vmatprep.subr.mxu0 %v113
    %391 = vmatpush1.msra.mxu0 %v112
    %392 = vmatprep.subr.mxu0 %v115
    %393 = vmatpush1.msra.mxu0 %v114
    %394 = vmatprep.subr.mxu0 %v117
    %395 = vmatpush1.msra.mxu0 %v116
    %396 = vmatprep.subr.mxu0 %v119
    %397 = vmatpush1.msra.mxu0 %v118
    %398 = vmatprep.subr.mxu0 %v121
    %399 = vmatpush1.msra.mxu0 %v120
    %400 = vmatprep.subr.mxu0 %v123
    %401 = vmatpush1.msra.mxu0 %v122
    %402 = vmatprep.subr.mxu0 %v125
    %403 = vmatpush1.msra.mxu0 %v124
    %404 = vmatprep.subr.mxu0 %v127
    %405 = vmatpush1.msra.mxu0 %v126
    %406 = vmatprep.subr.mxu0 %v129
    %407 = vmatpush1.msra.mxu0 %v128
    %408 = vmatprep.subr.mxu0 %v131
    %409 = vmatpush1.msra.mxu0 %v130
    %410 = vmatprep.subr.mxu0 %v133
    %411 = vmatpush1.msra.mxu0 %v132
    %412 = vmatprep.subr.mxu0 %v135
    %413 = vmatpush1.msra.mxu0 %v134
    %414 = vmatprep.subr.mxu0 %v137
    %415 = vmatpush1.msra.mxu0 %v136
    %416 = vmatprep.subr.mxu0 %v139
    %417 = vmatpush1.msra.mxu0 %v138
    %418 = vmatprep.subr.mxu0 %v141
    %419 = vmatpush1.msra.mxu0 %v140
    %420 = vmatprep.subr.mxu0 %v143
    %421 = vmatpush1.msra.mxu0 %v142
    %422 = vmatprep.subr.mxu0 %v145
    %423 = vmatpush1.msra.mxu0 %v144
    %424 = vmatprep.subr.mxu0 %v147
    %425 = vmatpush1.msra.mxu0 %v146
    %426 = vmatprep.subr.mxu0 %v149
    %427 = vmatpush1.msra.mxu0 %v148
    %428 = vmatprep.subr.mxu0 %v151
    %429 = vmatpush1.msra.mxu0 %v150
    %430 = vmatprep.subr.mxu0 %v153
    %431 = vmatpush1.msra.mxu0 %v152
    %432 = vmatprep.subr.mxu0 %v155
    %433 = vmatpush1.msra.mxu0 %v154
    %434 = vmatprep.subr.mxu0 %v157
    %435 = vmatpush1.msra.mxu0 %v156
    %436 = vmatprep.subr.mxu0 %v159
    %437 = vmatpush1.msra.mxu0 %v158
    %438 = vmatprep.subr.mxu0 %v161
    %439 = vmatpush1.msra.mxu0 %v160
    %440 = vmatprep.subr.mxu0 %v163
    %441 = vmatpush1.msra.mxu0 %v162
    %442 = vmatprep.subr.mxu0 %v165
    %443 = vmatpush1.msra.mxu0 %v164
    %444 = vmatprep.subr.mxu0 %v167
    %445 = vmatpush1.msra.mxu0 %v166
    %446 = vmatprep.subr.mxu0 %v169
    %447 = vmatpush1.msra.mxu0 %v168
    %448 = vmatprep.subr.mxu0 %v171
    %449 = vmatpush1.msra.mxu0 %v170
    %450 = vmatprep.mubr.f32.mxu0 %v385
    %451 = vmatmul.mubr.f32.gmra.mrb[0].mxu0 %v384
    %v452 = vpop.f32.mrb[0].mxu0
    %v453 = vadd.f32 1e-05, %v452
    %v454 = vpop.f32.mrb[0].mxu0
    %v455 = vadd.f32 1e-05, %v454
    %456 = vdwg.mxu0
    %v457 = vrsqrt.pop %v453
    %v458 = vrsqrt.pop %v455
    %v459 = vmul.f32 %v382, %v457
    %v460 = vmul.f32 %v383, %v458
    %v462 = vlaneseq
    %v463 = vshrl.u32 %v462, 7
    %v464 = vsub.s32 0, %v463
    %v465 = vrot.slane %v309, %v464
    %v466 = vlaneseq
    %v467 = vshrl.u32 %v466, 7
    %v468 = vsub.s32 1, %v467
    %v469 = vrot.slane %v309, %v468
    %v472 = vmul.f32 %v459, %v465
    %v473 = vmul.f32 %v460, %v469
    %v475 = vlaneseq
    %v476 = vshrl.u32 %v475, 7
    %v477 = vsub.s32 0, %v476
    %v478 = vrot.slane %v310, %v477
    %v479 = vlaneseq
    %v480 = vshrl.u32 %v479, 7
    %v481 = vsub.s32 1, %v480
    %v482 = vrot.slane %v310, %v481
    %v485 = vadd.f32 %v472, %v478
    %v486 = vadd.f32 %v473, %v482
    %v487 = vadd.f32 %v102, %v485
    %v488 = vadd.f32 %v103, %v486
    %v489 = vld [vmem:[#allocation2] sm:$0xff]
    %v490 = vld [vmem:[#allocation2 + $0x8] sm:$0xff]
    %v491 = vld [vmem:[#allocation2 + $0x10] sm:$0xff]
    %v492 = vld [vmem:[#allocation2 + $0x18] sm:$0xff]
    %v493 = vld [vmem:[#allocation2 + $0x20] sm:$0xff]
    %v494 = vld [vmem:[#allocation2 + $0x28] sm:$0xff]
    %v495 = vld [vmem:[#allocation2 + $0x30] sm:$0xff]
    %v496 = vld [vmem:[#allocation2 + $0x38] sm:$0xff]
    %v497 = vld [vmem:[#allocation2 + $0x40] sm:$0xff]
    %v498 = vld [vmem:[#allocation2 + $0x48] sm:$0xff]
    %v499 = vld [vmem:[#allocation2 + $0x50] sm:$0xff]
    %v500 = vld [vmem:[#allocation2 + $0x58] sm:$0xff]
    %v501 = vld [vmem:[#allocation2 + $0x60] sm:$0xff]
    %v502 = vld [vmem:[#allocation2 + $0x68] sm:$0xff]
    %v503 = vld [vmem:[#allocation2 + $0x70] sm:$0xff]
    %v504 = vld [vmem:[#allocation2 + $0x78] sm:$0xff]
    %v505 = vld [vmem:[#allocation2 + $0x80] sm:$0xff]
    %v506 = vld [vmem:[#allocation2 + $0x88] sm:$0xff]
    %v507 = vld [vmem:[#allocation2 + $0x90] sm:$0xff]
    %v508 = vld [vmem:[#allocation2 + $0x98] sm:$0xff]
    %v509 = vld [vmem:[#allocation2 + $0xa0] sm:$0xff]
    %v510 = vld [vmem:[#allocation2 + $0xa8] sm:$0xff]
    %v511 = vld [vmem:[#allocation2 + $0xb0] sm:$0xff]
    %v512 = vld [vmem:[#allocation2 + $0xb8] sm:$0xff]
    %v513 = vld [vmem:[#allocation2 + $0xc0] sm:$0xff]
    %v514 = vld [vmem:[#allocation2 + $0xc8] sm:$0xff]
    %v515 = vld [vmem:[#allocation2 + $0xd0] sm:$0xff]
    %v516 = vld [vmem:[#allocation2 + $0xd8] sm:$0xff]
    %v517 = vld [vmem:[#allocation2 + $0xe0] sm:$0xff]
    %v518 = vld [vmem:[#allocation2 + $0xe8] sm:$0xff]
    %v519 = vld [vmem:[#allocation2 + $0xf0] sm:$0xff]
    %v520 = vld [vmem:[#allocation2 + $0xf8] sm:$0xff]
    %v521 = vld [vmem:[#allocation2 + $0x100] sm:$0xff]
    %v522 = vld [vmem:[#allocation2 + $0x108] sm:$0xff]
    %v523 = vld [vmem:[#allocation2 + $0x110] sm:$0xff]
    %v524 = vld [vmem:[#allocation2 + $0x118] sm:$0xff]
    %v525 = vld [vmem:[#allocation2 + $0x120] sm:$0xff]
    %v526 = vld [vmem:[#allocation2 + $0x128] sm:$0xff]
    %v527 = vld [vmem:[#allocation2 + $0x130] sm:$0xff]
    %v528 = vld [vmem:[#allocation2 + $0x138] sm:$0xff]
    %v529 = vld [vmem:[#allocation2 + $0x140] sm:$0xff]
    %v530 = vld [vmem:[#allocation2 + $0x148] sm:$0xff]
    %v531 = vld [vmem:[#allocation2 + $0x150] sm:$0xff]
    %v532 = vld [vmem:[#allocation2 + $0x158] sm:$0xff]
    %v533 = vld [vmem:[#allocation2 + $0x160] sm:$0xff]
    %v534 = vld [vmem:[#allocation2 + $0x168] sm:$0xff]
    %v535 = vld [vmem:[#allocation2 + $0x170] sm:$0xff]
    %v536 = vld [vmem:[#allocation2 + $0x178] sm:$0xff]
    %v537 = vld [vmem:[#allocation2 + $0x180] sm:$0xff]
    %v538 = vld [vmem:[#allocation2 + $0x188] sm:$0xff]
    %v539 = vld [vmem:[#allocation2 + $0x190] sm:$0xff]
    %v540 = vld [vmem:[#allocation2 + $0x198] sm:$0xff]
    %v541 = vld [vmem:[#allocation2 + $0x1a0] sm:$0xff]
    %v542 = vld [vmem:[#allocation2 + $0x1a8] sm:$0xff]
    %v543 = vld [vmem:[#allocation2 + $0x1b0] sm:$0xff]
    %v544 = vld [vmem:[#allocation2 + $0x1b8] sm:$0xff]
    %v545 = vld [vmem:[#allocation2 + $0x1c0] sm:$0xff]
    %v546 = vld [vmem:[#allocation2 + $0x1c8] sm:$0xff]
    %v547 = vld [vmem:[#allocation2 + $0x1d0] sm:$0xff]
    %v548 = vld [vmem:[#allocation2 + $0x1d8] sm:$0xff]
    %v549 = vld [vmem:[#allocation2 + $0x1e0] sm:$0xff]
    %v550 = vld [vmem:[#allocation2 + $0x1e8] sm:$0xff]
    %v551 = vld [vmem:[#allocation2 + $0x1f0] sm:$0xff]
    %v552 = vld [vmem:[#allocation2 + $0x1f8] sm:$0xff]
    %v553 = vld [vmem:[%s7] sm:$0x3]
    %v555 = vlaneseq
    %v556 = vshrl.u32 %v555, 7
    %v557 = vsub.s32 0, %v556
    %v558 = vrot.slane %v553, %v557
    %v559 = vlaneseq
    %v560 = vshrl.u32 %v559, 7
    %v561 = vsub.s32 1, %v560
    %v562 = vrot.slane %v553, %v561
    %565 = vmatprep.subr.mxu0 %v490
    %566 = vmatpush1.msra.mxu0 %v489
    %567 = vmatprep.subr.mxu0 %v492
    %568 = vmatpush1.msra.mxu0 %v491
    %569 = vmatprep.subr.mxu0 %v494
    %570 = vmatpush1.msra.mxu0 %v493
    %571 = vmatprep.subr.mxu0 %v496
    %572 = vmatpush1.msra.mxu0 %v495
    %573 = vmatprep.subr.mxu0 %v498
    %574 = vmatpush1.msra.mxu0 %v497
    %575 = vmatprep.subr.mxu0 %v500
    %576 = vmatpush1.msra.mxu0 %v499
    %577 = vmatprep.subr.mxu0 %v502
    %578 = vmatpush1.msra.mxu0 %v501
    %579 = vmatprep.subr.mxu0 %v504
    %580 = vmatpush1.msra.mxu0 %v503
    %581 = vmatprep.subr.mxu0 %v506
    %582 = vmatpush1.msra.mxu0 %v505
    %583 = vmatprep.subr.mxu0 %v508
    %584 = vmatpush1.msra.mxu0 %v507
    %585 = vmatprep.subr.mxu0 %v510
    %586 = vmatpush1.msra.mxu0 %v509
    %587 = vmatprep.subr.mxu0 %v512
    %588 = vmatpush1.msra.mxu0 %v511
    %589 = vmatprep.subr.mxu0 %v514
    %590 = vmatpush1.msra.mxu0 %v513
    %591 = vmatprep.subr.mxu0 %v516
    %592 = vmatpush1.msra.mxu0 %v515
    %593 = vmatprep.subr.mxu0 %v518
    %594 = vmatpush1.msra.mxu0 %v517
    %595 = vmatprep.subr.mxu0 %v520
    %596 = vmatpush1.msra.mxu0 %v519
    %597 = vmatprep.subr.mxu0 %v522
    %598 = vmatpush1.msra.mxu0 %v521
    %599 = vmatprep.subr.mxu0 %v524
    %600 = vmatpush1.msra.mxu0 %v523
    %601 = vmatprep.subr.mxu0 %v526
    %602 = vmatpush1.msra.mxu0 %v525
    %603 = vmatprep.subr.mxu0 %v528
    %604 = vmatpush1.msra.mxu0 %v527
    %605 = vmatprep.subr.mxu0 %v530
    %606 = vmatpush1.msra.mxu0 %v529
    %607 = vmatprep.subr.mxu0 %v532
    %608 = vmatpush1.msra.mxu0 %v531
    %609 = vmatprep.subr.mxu0 %v534
    %610 = vmatpush1.msra.mxu0 %v533
    %611 = vmatprep.subr.mxu0 %v536
    %612 = vmatpush1.msra.mxu0 %v535
    %613 = vmatprep.subr.mxu0 %v538
    %614 = vmatpush1.msra.mxu0 %v537
    %615 = vmatprep.subr.mxu0 %v540
    %616 = vmatpush1.msra.mxu0 %v539
    %617 = vmatprep.subr.mxu0 %v542
    %618 = vmatpush1.msra.mxu0 %v541
    %619 = vmatprep.subr.mxu0 %v544
    %620 = vmatpush1.msra.mxu0 %v543
    %621 = vmatprep.subr.mxu0 %v546
    %622 = vmatpush1.msra.mxu0 %v545
    %623 = vmatprep.subr.mxu0 %v548
    %624 = vmatpush1.msra.mxu0 %v547
    %625 = vmatprep.subr.mxu0 %v550
    %626 = vmatpush1.msra.mxu0 %v549
    %627 = vmatprep.subr.mxu0 %v552
    %628 = vmatpush1.msra.mxu0 %v551
    %629 = vmatprep.mubr.f32.mxu0 %v488
    %630 = vmatmul.mubr.f32.gmra.mrb[0].mxu0 %v487
    %v631 = vpop.f32.mrb[0].mxu0
    %v632 = vadd.f32 %v558, %v631
    %v633 = vpop.f32.mrb[0].mxu0
    %v634 = vadd.f32 %v562, %v633
    %635 = vdwg.mxu0
    %v636 = vmax.f32 %v632, 0.0
    %v637 = vmax.f32 %v634, 0.0
    %v638 = vld [vmem:[#allocation4] sm:$0xff]
    %v639 = vld [vmem:[#allocation4 + $0x8] sm:$0xff]
    %v640 = vld [vmem:[#allocation4 + $0x10] sm:$0xff]
    %v641 = vld [vmem:[#allocation4 + $0x18] sm:$0xff]
    %v642 = vld [vmem:[#allocation4 + $0x20] sm:$0xff]
    %v643 = vld [vmem:[#allocation4 + $0x28] sm:$0xff]
    %v644 = vld [vmem:[#allocation4 + $0x30] sm:$0xff]
    %v645 = vld [vmem:[#allocation4 + $0x38] sm:$0xff]
    %v646 = vld [vmem:[#allocation4 + $0x40] sm:$0xff]
    %v647 = vld [vmem:[#allocation4 + $0x48] sm:$0xff]
    %v648 = vld [vmem:[#allocation4 + $0x50] sm:$0xff]
    %v649 = vld [vmem:[#allocation4 + $0x58] sm:$0xff]
    %v650 = vld [vmem:[#allocation4 + $0x60] sm:$0xff]
    %v651 = vld [vmem:[#allocation4 + $0x68] sm:$0xff]
    %v652 = vld [vmem:[#allocation4 + $0x70] sm:$0xff]
    %v653 = vld [vmem:[#allocation4 + $0x78] sm:$0xff]
    %v654 = vld [vmem:[#allocation4 + $0x80] sm:$0xff]
    %v655 = vld [vmem:[#allocation4 + $0x88] sm:$0xff]
    %v656 = vld [vmem:[#allocation4 + $0x90] sm:$0xff]
    %v657 = vld [vmem:[#allocation4 + $0x98] sm:$0xff]
    %v658 = vld [vmem:[#allocation4 + $0xa0] sm:$0xff]
    %v659 = vld [vmem:[#allocation4 + $0xa8] sm:$0xff]
    %v660 = vld [vmem:[#allocation4 + $0xb0] sm:$0xff]
    %v661 = vld [vmem:[#allocation4 + $0xb8] sm:$0xff]
    %v662 = vld [vmem:[#allocation4 + $0xc0] sm:$0xff]
    %v663 = vld [vmem:[#allocation4 + $0xc8] sm:$0xff]
    %v664 = vld [vmem:[#allocation4 + $0xd0] sm:$0xff]
    %v665 = vld [vmem:[#allocation4 + $0xd8] sm:$0xff]
    %v666 = vld [vmem:[#allocation4 + $0xe0] sm:$0xff]
    %v667 = vld [vmem:[#allocation4 + $0xe8] sm:$0xff]
    %v668 = vld [vmem:[#allocation4 + $0xf0] sm:$0xff]
    %v669 = vld [vmem:[#allocation4 + $0xf8] sm:$0xff]
    %v670 = vld [vmem:[#allocation4 + $0x100] sm:$0xff]
    %v671 = vld [vmem:[#allocation4 + $0x108] sm:$0xff]
    %v672 = vld [vmem:[#allocation4 + $0x110] sm:$0xff]
    %v673 = vld [vmem:[#allocation4 + $0x118] sm:$0xff]
    %v674 = vld [vmem:[#allocation4 + $0x120] sm:$0xff]
    %v675 = vld [vmem:[#allocation4 + $0x128] sm:$0xff]
    %v676 = vld [vmem:[#allocation4 + $0x130] sm:$0xff]
    %v677 = vld [vmem:[#allocation4 + $0x138] sm:$0xff]
    %v678 = vld [vmem:[#allocation4 + $0x140] sm:$0xff]
    %v679 = vld [vmem:[#allocation4 + $0x148] sm:$0xff]
    %v680 = vld [vmem:[#allocation4 + $0x150] sm:$0xff]
    %v681 = vld [vmem:[#allocation4 + $0x158] sm:$0xff]
    %v682 = vld [vmem:[#allocation4 + $0x160] sm:$0xff]
    %v683 = vld [vmem:[#allocation4 + $0x168] sm:$0xff]
    %v684 = vld [vmem:[#allocation4 + $0x170] sm:$0xff]
    %v685 = vld [vmem:[#allocation4 + $0x178] sm:$0xff]
    %v686 = vld [vmem:[#allocation4 + $0x180] sm:$0xff]
    %v687 = vld [vmem:[#allocation4 + $0x188] sm:$0xff]
    %v688 = vld [vmem:[#allocation4 + $0x190] sm:$0xff]
    %v689 = vld [vmem:[#allocation4 + $0x198] sm:$0xff]
    %v690 = vld [vmem:[#allocation4 + $0x1a0] sm:$0xff]
    %v691 = vld [vmem:[#allocation4 + $0x1a8] sm:$0xff]
    %v692 = vld [vmem:[#allocation4 + $0x1b0] sm:$0xff]
    %v693 = vld [vmem:[#allocation4 + $0x1b8] sm:$0xff]
    %v694 = vld [vmem:[#allocation4 + $0x1c0] sm:$0xff]
    %v695 = vld [vmem:[#allocation4 + $0x1c8] sm:$0xff]
    %v696 = vld [vmem:[#allocation4 + $0x1d0] sm:$0xff]
    %v697 = vld [vmem:[#allocation4 + $0x1d8] sm:$0xff]
    %v698 = vld [vmem:[#allocation4 + $0x1e0] sm:$0xff]
    %v699 = vld [vmem:[#allocation4 + $0x1e8] sm:$0xff]
    %v700 = vld [vmem:[#allocation4 + $0x1f0] sm:$0xff]
    %v701 = vld [vmem:[#allocation4 + $0x1f8] sm:$0xff]
    %v702 = vld [vmem:[%s9] sm:$0x3]
    %v704 = vlaneseq
    %v705 = vshrl.u32 %v704, 7
    %v706 = vsub.s32 0, %v705
    %v707 = vrot.slane %v702, %v706
    %v708 = vlaneseq
    %v709 = vshrl.u32 %v708, 7
    %v710 = vsub.s32 1, %v709
    %v711 = vrot.slane %v702, %v710
    %714 = vmatprep.subr.mxu0 %v639
    %715 = vmatpush1.msra.mxu0 %v638
    %716 = vmatprep.subr.mxu0 %v641
    %717 = vmatpush1.msra.mxu0 %v640
    %718 = vmatprep.subr.mxu0 %v643
    %719 = vmatpush1.msra.mxu0 %v642
    %720 = vmatprep.subr.mxu0 %v645
    %721 = vmatpush1.msra.mxu0 %v644
    %722 = vmatprep.subr.mxu0 %v647
    %723 = vmatpush1.msra.mxu0 %v646
    %724 = vmatprep.subr.mxu0 %v649
    %725 = vmatpush1.msra.mxu0 %v648
    %726 = vmatprep.subr.mxu0 %v651
    %727 = vmatpush1.msra.mxu0 %v650
    %728 = vmatprep.subr.mxu0 %v653
    %729 = vmatpush1.msra.mxu0 %v652
    %730 = vmatprep.subr.mxu0 %v655
    %731 = vmatpush1.msra.mxu0 %v654
    %732 = vmatprep.subr.mxu0 %v657
    %733 = vmatpush1.msra.mxu0 %v656
    %734 = vmatprep.subr.mxu0 %v659
    %735 = vmatpush1.msra.mxu0 %v658
    %736 = vmatprep.subr.mxu0 %v661
    %737 = vmatpush1.msra.mxu0 %v660
    %738 = vmatprep.subr.mxu0 %v663
    %739 = vmatpush1.msra.mxu0 %v662
    %740 = vmatprep.subr.mxu0 %v665
    %741 = vmatpush1.msra.mxu0 %v664
    %742 = vmatprep.subr.mxu0 %v667
    %743 = vmatpush1.msra.mxu0 %v666
    %744 = vmatprep.subr.mxu0 %v669
    %745 = vmatpush1.msra.mxu0 %v668
    %746 = vmatprep.subr.mxu0 %v671
    %747 = vmatpush1.msra.mxu0 %v670
    %748 = vmatprep.subr.mxu0 %v673
    %749 = vmatpush1.msra.mxu0 %v672
    %750 = vmatprep.subr.mxu0 %v675
    %751 = vmatpush1.msra.mxu0 %v674
    %752 = vmatprep.subr.mxu0 %v677
    %753 = vmatpush1.msra.mxu0 %v676
    %754 = vmatprep.subr.mxu0 %v679
    %755 = vmatpush1.msra.mxu0 %v678
    %756 = vmatprep.subr.mxu0 %v681
    %757 = vmatpush1.msra.mxu0 %v680
    %758 = vmatprep.subr.mxu0 %v683
    %759 = vmatpush1.msra.mxu0 %v682
    %760 = vmatprep.subr.mxu0 %v685
    %761 = vmatpush1.msra.mxu0 %v684
    %762 = vmatprep.subr.mxu0 %v687
    %763 = vmatpush1.msra.mxu0 %v686
    %764 = vmatprep.subr.mxu0 %v689
    %765 = vmatpush1.msra.mxu0 %v688
    %766 = vmatprep.subr.mxu0 %v691
    %767 = vmatpush1.msra.mxu0 %v690
    %768 = vmatprep.subr.mxu0 %v693
    %769 = vmatpush1.msra.mxu0 %v692
    %770 = vmatprep.subr.mxu0 %v695
    %771 = vmatpush1.msra.mxu0 %v694
    %772 = vmatprep.subr.mxu0 %v697
    %773 = vmatpush1.msra.mxu0 %v696
    %774 = vmatprep.subr.mxu0 %v699
    %775 = vmatpush1.msra.mxu0 %v698
    %776 = vmatprep.subr.mxu0 %v701
    %777 = vmatpush1.msra.mxu0 %v700
    %778 = vmatprep.mubr.f32.mxu0 %v637
    %779 = vmatmul.mubr.f32.gmra.mrb[0].mxu0 %v636
    %v780 = vpop.f32.mrb[0].mxu0
    %v781 = vadd.f32 %v707, %v780
    %v782 = vpop.f32.mrb[0].mxu0
    %v783 = vadd.f32 %v711, %v782
    %784 = vdwg.mxu0
    %v785 = vld [vmem:[%s10] sm:$0x3]
    %v786 = vld [vmem:[%s11] sm:$0x3]
    %787 = vmatprep.subr.mxu0 %v109
    %788 = vmatpush1.msra.mxu0 %v108
    %789 = vmatprep.subr.mxu0 %v111
    %790 = vmatpush1.msra.mxu0 %v110
    %791 = vmatprep.subr.mxu0 %v113
    %792 = vmatpush1.msra.mxu0 %v112
    %793 = vmatprep.subr.mxu0 %v115
    %794 = vmatpush1.msra.mxu0 %v114
    %795 = vmatprep.subr.mxu0 %v117
    %796 = vmatpush1.msra.mxu0 %v116
    %797 = vmatprep.subr.mxu0 %v119
    %798 = vmatpush1.msra.mxu0 %v118
    %799 = vmatprep.subr.mxu0 %v121
    %800 = vmatpush1.msra.mxu0 %v120
    %801 = vmatprep.subr.mxu0 %v123
    %802 = vmatpush1.msra.mxu0 %v122
    %803 = vmatprep.subr.mxu0 %v125
    %804 = vmatpush1.msra.mxu0 %v124
    %805 = vmatprep.subr.mxu0 %v127
    %806 = vmatpush1.msra.mxu0 %v126
    %807 = vmatprep.subr.mxu0 %v129
    %808 = vmatpush1.msra.mxu0 %v128
    %809 = vmatprep.subr.mxu0 %v131
    %810 = vmatpush1.msra.mxu0 %v130
    %811 = vmatprep.subr.mxu0 %v133
    %812 = vmatpush1.msra.mxu0 %v132
    %813 = vmatprep.subr.mxu0 %v135
    %814 = vmatpush1.msra.mxu0 %v134
    %815 = vmatprep.subr.mxu0 %v137
    %816 = vmatpush1.msra.mxu0 %v136
    %817 = vmatprep.subr.mxu0 %v139
    %818 = vmatpush1.msra.mxu0 %v138
    %819 = vmatprep.subr.mxu0 %v141
    %820 = vmatpush1.msra.mxu0 %v140
    %821 = vmatprep.subr.mxu0 %v143
    %822 = vmatpush1.msra.mxu0 %v142
    %823 = vmatprep.subr.mxu0 %v145
    %824 = vmatpush1.msra.mxu0 %v144
    %825 = vmatprep.subr.mxu0 %v147
    %826 = vmatpush1.msra.mxu0 %v146
    %827 = vmatprep.subr.mxu0 %v149
    %828 = vmatpush1.msra.mxu0 %v148
    %829 = vmatprep.subr.mxu0 %v151
    %830 = vmatpush1.msra.mxu0 %v150
    %831 = vmatprep.subr.mxu0 %v153
    %832 = vmatpush1.msra.mxu0 %v152
    %833 = vmatprep.subr.mxu0 %v155
    %834 = vmatpush1.msra.mxu0 %v154
    %835 = vmatprep.subr.mxu0 %v157
    %836 = vmatpush1.msra.mxu0 %v156
    %837 = vmatprep.subr.mxu0 %v159
    %838 = vmatpush1.msra.mxu0 %v158
    %839 = vmatprep.subr.mxu0 %v161
    %840 = vmatpush1.msra.mxu0 %v160
    %841 = vmatprep.subr.mxu0 %v163
    %842 = vmatpush1.msra.mxu0 %v162
    %843 = vmatprep.subr.mxu0 %v165
    %844 = vmatpush1.msra.mxu0 %v164
    %845 = vmatprep.subr.mxu0 %v167
    %846 = vmatpush1.msra.mxu0 %v166
    %847 = vmatprep.subr.mxu0 %v169
    %848 = vmatpush1.msra.mxu0 %v168
    %849 = vmatprep.subr.mxu0 %v171
    %850 = vmatpush1.msra.mxu0 %v170
    %851 = vmatprep.mubr.f32.mxu0 %v783
    %852 = vmatmul.mubr.f32.gmra.mrb[0].mxu0 %v781
    %v853 = vpop.f32.mrb[0].mxu0
    %v854 = vadd.f32 0.0, %v853
    %v855 = vpop.f32.mrb[0].mxu0
    %v856 = vadd.f32 0.0, %v855
    %857 = vdwg.mxu0
    %v858 = vsub.f32 %v781, %v854
    %v859 = vsub.f32 %v783, %v856
    %v860 = vmul.f32 %v858, %v858
    %v861 = vmul.f32 %v859, %v859
    %862 = vmatprep.subr.mxu0 %v109
    %863 = vmatpush1.msra.mxu0 %v108
    %864 = vmatprep.subr.mxu0 %v111
    %865 = vmatpush1.msra.mxu0 %v110
    %866 = vmatprep.subr.mxu0 %v113
    %867 = vmatpush1.msra.mxu0 %v112
    %868 = vmatprep.subr.mxu0 %v115
    %869 = vmatpush1.msra.mxu0 %v114
    %870 = vmatprep.subr.mxu0 %v117
    %871 = vmatpush1.msra.mxu0 %v116
    %872 = vmatprep.subr.mxu0 %v119
    %873 = vmatpush1.msra.mxu0 %v118
    %874 = vmatprep.subr.mxu0 %v121
    %875 = vmatpush1.msra.mxu0 %v120
    %876 = vmatprep.subr.mxu0 %v123
    %877 = vmatpush1.msra.mxu0 %v122
    %878 = vmatprep.subr.mxu0 %v125
    %879 = vmatpush1.msra.mxu0 %v124
    %880 = vmatprep.subr.mxu0 %v127
    %881 = vmatpush1.msra.mxu0 %v126
    %882 = vmatprep.subr.mxu0 %v129
    %883 = vmatpush1.msra.mxu0 %v128
    %884 = vmatprep.subr.mxu0 %v131
    %885 = vmatpush1.msra.mxu0 %v130
    %886 = vmatprep.subr.mxu0 %v133
    %887 = vmatpush1.msra.mxu0 %v132
    %888 = vmatprep.subr.mxu0 %v135
    %889 = vmatpush1.msra.mxu0 %v134
    %890 = vmatprep.subr.mxu0 %v137
    %891 = vmatpush1.msra.mxu0 %v136
    %892 = vmatprep.subr.mxu0 %v139
    %893 = vmatpush1.msra.mxu0 %v138
    %894 = vmatprep.subr.mxu0 %v141
    %895 = vmatpush1.msra.mxu0 %v140
    %896 = vmatprep.subr.mxu0 %v143
    %897 = vmatpush1.msra.mxu0 %v142
    %898 = vmatprep.subr.mxu0 %v145
    %899 = vmatpush1.msra.mxu0 %v144
    %900 = vmatprep.subr.mxu0 %v147
    %901 = vmatpush1.msra.mxu0 %v146
    %902 = vmatprep.subr.mxu0 %v149
    %903 = vmatpush1.msra.mxu0 %v148
    %904 = vmatprep.subr.mxu0 %v151
    %905 = vmatpush1.msra.mxu0 %v150
    %906 = vmatprep.subr.mxu0 %v153
    %907 = vmatpush1.msra.mxu0 %v152
    %908 = vmatprep.subr.mxu0 %v155
    %909 = vmatpush1.msra.mxu0 %v154
    %910 = vmatprep.subr.mxu0 %v157
    %911 = vmatpush1.msra.mxu0 %v156
    %912 = vmatprep.subr.mxu0 %v159
    %913 = vmatpush1.msra.mxu0 %v158
    %914 = vmatprep.subr.mxu0 %v161
    %915 = vmatpush1.msra.mxu0 %v160
    %916 = vmatprep.subr.mxu0 %v163
    %917 = vmatpush1.msra.mxu0 %v162
    %918 = vmatprep.subr.mxu0 %v165
    %919 = vmatpush1.msra.mxu0 %v164
    %920 = vmatprep.subr.mxu0 %v167
    %921 = vmatpush1.msra.mxu0 %v166
    %922 = vmatprep.subr.mxu0 %v169
    %923 = vmatpush1.msra.mxu0 %v168
    %924 = vmatprep.subr.mxu0 %v171
    %925 = vmatpush1.msra.mxu0 %v170
    %926 = vmatprep.mubr.f32.mxu0 %v861
    %927 = vmatmul.mubr.f32.gmra.mrb[0].mxu0 %v860
    %v928 = vpop.f32.mrb[0].mxu0
    %v929 = vadd.f32 1e-05, %v928
    %v930 = vpop.f32.mrb[0].mxu0
    %v931 = vadd.f32 1e-05, %v930
    %932 = vdwg.mxu0
    %v933 = vrsqrt.pop %v929
    %v934 = vrsqrt.pop %v931
    %v935 = vmul.f32 %v858, %v933
    %v936 = vmul.f32 %v859, %v934
    %v938 = vlaneseq
    %v939 = vshrl.u32 %v938, 7
    %v940 = vsub.s32 0, %v939
    %v941 = vrot.slane %v785, %v940
    %v942 = vlaneseq
    %v943 = vshrl.u32 %v942, 7
    %v944 = vsub.s32 1, %v943
    %v945 = vrot.slane %v785, %v944
    %v948 = vmul.f32 %v935, %v941
    %v949 = vmul.f32 %v936, %v945
    %v951 = vlaneseq
    %v952 = vshrl.u32 %v951, 7
    %v953 = vsub.s32 0, %v952
    %v954 = vrot.slane %v786, %v953
    %v955 = vlaneseq
    %v956 = vshrl.u32 %v955, 7
    %v957 = vsub.s32 1, %v956
    %v958 = vrot.slane %v786, %v957
    %v961 = vadd.f32 %v948, %v954
    %v962 = vadd.f32 %v949, %v958
    %v963 = vadd.f32 %v487, %v961
    %v964 = vadd.f32 %v488, %v962
    %v965 = vmul.f32 %v963, %v104
    %v966 = vmul.f32 %v964, %v105
    %s967 = scalar_lea.vmem %s3, 512
    %v968 = vld [vmem:[%s967] sm:$0xff]
    %v969 = vld [vmem:[%s967 + $0x8] sm:$0xff]
    %v970 = vld [vmem:[%s967 + $0x10] sm:$0xff]
    %v971 = vld [vmem:[%s967 + $0x18] sm:$0xff]
    %v972 = vld [vmem:[%s967 + $0x20] sm:$0xff]
    %v973 = vld [vmem:[%s967 + $0x28] sm:$0xff]
    %v974 = vld [vmem:[%s967 + $0x30] sm:$0xff]
    %v975 = vld [vmem:[%s967 + $0x38] sm:$0xff]
    %v976 = vld [vmem:[%s967 + $0x40] sm:$0xff]
    %v977 = vld [vmem:[%s967 + $0x48] sm:$0xff]
    %v978 = vld [vmem:[%s967 + $0x50] sm:$0xff]
    %v979 = vld [vmem:[%s967 + $0x58] sm:$0xff]
    %v980 = vld [vmem:[%s967 + $0x60] sm:$0xff]
    %v981 = vld [vmem:[%s967 + $0x68] sm:$0xff]
    %v982 = vld [vmem:[%s967 + $0x70] sm:$0xff]
    %v983 = vld [vmem:[%s967 + $0x78] sm:$0xff]
    %v984 = vld [vmem:[%s967 + $0x80] sm:$0xff]
    %v985 = vld [vmem:[%s967 + $0x88] sm:$0xff]
    %v986 = vld [vmem:[%s967 + $0x90] sm:$0xff]
    %v987 = vld [vmem:[%s967 + $0x98] sm:$0xff]
    %v988 = vld [vmem:[%s967 + $0xa0] sm:$0xff]
    %v989 = vld [vmem:[%s967 + $0xa8] sm:$0xff]
    %v990 = vld [vmem:[%s967 + $0xb0] sm:$0xff]
    %v991 = vld [vmem:[%s967 + $0xb8] sm:$0xff]
    %v992 = vld [vmem:[%s967 + $0xc0] sm:$0xff]
    %v993 = vld [vmem:[%s967 + $0xc8] sm:$0xff]
    %v994 = vld [vmem:[%s967 + $0xd0] sm:$0xff]
    %v995 = vld [vmem:[%s967 + $0xd8] sm:$0xff]
    %v996 = vld [vmem:[%s967 + $0xe0] sm:$0xff]
    %v997 = vld [vmem:[%s967 + $0xe8] sm:$0xff]
    %v998 = vld [vmem:[%s967 + $0xf0] sm:$0xff]
    %v999 = vld [vmem:[%s967 + $0xf8] sm:$0xff]
    %v1000 = vld [vmem:[%s967 + $0x100] sm:$0xff]
    %v1001 = vld [vmem:[%s967 + $0x108] sm:$0xff]
    %v1002 = vld [vmem:[%s967 + $0x110] sm:$0xff]
    %v1003 = vld [vmem:[%s967 + $0x118] sm:$0xff]
    %v1004 = vld [vmem:[%s967 + $0x120] sm:$0xff]
    %v1005 = vld [vmem:[%s967 + $0x128] sm:$0xff]
    %v1006 = vld [vmem:[%s967 + $0x130] sm:$0xff]
    %v1007 = vld [vmem:[%s967 + $0x138] sm:$0xff]
    %v1008 = vld [vmem:[%s967 + $0x140] sm:$0xff]
    %v1009 = vld [vmem:[%s967 + $0x148] sm:$0xff]
    %v1010 = vld [vmem:[%s967 + $0x150] sm:$0xff]
    %v1011 = vld [vmem:[%s967 + $0x158] sm:$0xff]
    %v1012 = vld [vmem:[%s967 + $0x160] sm:$0xff]
    %v1013 = vld [vmem:[%s967 + $0x168] sm:$0xff]
    %v1014 = vld [vmem:[%s967 + $0x170] sm:$0xff]
    %v1015 = vld [vmem:[%s967 + $0x178] sm:$0xff]
    %v1016 = vld [vmem:[%s967 + $0x180] sm:$0xff]
    %v1017 = vld [vmem:[%s967 + $0x188] sm:$0xff]
    %v1018 = vld [vmem:[%s967 + $0x190] sm:$0xff]
    %v1019 = vld [vmem:[%s967 + $0x198] sm:$0xff]
    %v1020 = vld [vmem:[%s967 + $0x1a0] sm:$0xff]
    %v1021 = vld [vmem:[%s967 + $0x1a8] sm:$0xff]
    %v1022 = vld [vmem:[%s967 + $0x1b0] sm:$0xff]
    %v1023 = vld [vmem:[%s967 + $0x1b8] sm:$0xff]
    %v1024 = vld [vmem:[%s967 + $0x1c0] sm:$0xff]
    %v1025 = vld [vmem:[%s967 + $0x1c8] sm:$0xff]
    %v1026 = vld [vmem:[%s967 + $0x1d0] sm:$0xff]
    %v1027 = vld [vmem:[%s967 + $0x1d8] sm:$0xff]
    %v1028 = vld [vmem:[%s967 + $0x1e0] sm:$0xff]
    %v1029 = vld [vmem:[%s967 + $0x1e8] sm:$0xff]
    %v1030 = vld [vmem:[%s967 + $0x1f0] sm:$0xff]
    %v1031 = vld [vmem:[%s967 + $0x1f8] sm:$0xff]
    %1032 = vmatprep.subr.mxu0 %v969
    %1033 = vmatpush1.msra.mxu0 %v968
    %1034 = vmatprep.subr.mxu0 %v971
    %1035 = vmatpush1.msra.mxu0 %v970
    %1036 = vmatprep.subr.mxu0 %v973
    %1037 = vmatpush1.msra.mxu0 %v972
    %1038 = vmatprep.subr.mxu0 %v975
    %1039 = vmatpush1.msra.mxu0 %v974
    %1040 = vmatprep.subr.mxu0 %v977
    %1041 = vmatpush1.msra.mxu0 %v976
    %1042 = vmatprep.subr.mxu0 %v979
    %1043 = vmatpush1.msra.mxu0 %v978
    %1044 = vmatprep.subr.mxu0 %v981
    %1045 = vmatpush1.msra.mxu0 %v980
    %1046 = vmatprep.subr.mxu0 %v983
    %1047 = vmatpush1.msra.mxu0 %v982
    %1048 = vmatprep.subr.mxu0 %v985
    %1049 = vmatpush1.msra.mxu0 %v984
    %1050 = vmatprep.subr.mxu0 %v987
    %1051 = vmatpush1.msra.mxu0 %v986
    %1052 = vmatprep.subr.mxu0 %v989
    %1053 = vmatpush1.msra.mxu0 %v988
    %1054 = vmatprep.subr.mxu0 %v991
    %1055 = vmatpush1.msra.mxu0 %v990
    %1056 = vmatprep.subr.mxu0 %v993
    %1057 = vmatpush1.msra.mxu0 %v992
    %1058 = vmatprep.subr.mxu0 %v995
    %1059 = vmatpush1.msra.mxu0 %v994
    %1060 = vmatprep.subr.mxu0 %v997
    %1061 = vmatpush1.msra.mxu0 %v996
    %1062 = vmatprep.subr.mxu0 %v999
    %1063 = vmatpush1.msra.mxu0 %v998
    %1064 = vmatprep.subr.mxu0 %v1001
    %1065 = vmatpush1.msra.mxu0 %v1000
    %1066 = vmatprep.subr.mxu0 %v1003
    %1067 = vmatpush1.msra.mxu0 %v1002
    %1068 = vmatprep.subr.mxu0 %v1005
    %1069 = vmatpush1.msra.mxu0 %v1004
    %1070 = vmatprep.subr.mxu0 %v1007
    %1071 = vmatpush1.msra.mxu0 %v1006
    %1072 = vmatprep.subr.mxu0 %v1009
    %1073 = vmatpush1.msra.mxu0 %v1008
    %1074 = vmatprep.subr.mxu0 %v1011
    %1075 = vmatpush1.msra.mxu0 %v1010
    %1076 = vmatprep.subr.mxu0 %v1013
    %1077 = vmatpush1.msra.mxu0 %v1012
    %1078 = vmatprep.subr.mxu0 %v1015
    %1079 = vmatpush1.msra.mxu0 %v1014
    %1080 = vmatprep.subr.mxu0 %v1017
    %1081 = vmatpush1.msra.mxu0 %v1016
    %1082 = vmatprep.subr.mxu0 %v1019
    %1083 = vmatpush1.msra.mxu0 %v1018
    %1084 = vmatprep.subr.mxu0 %v1021
    %1085 = vmatpush1.msra.mxu0 %v1020
    %1086 = vmatprep.subr.mxu0 %v1023
    %1087 = vmatpush1.msra.mxu0 %v1022
    %1088 = vmatprep.subr.mxu0 %v1025
    %1089 = vmatpush1.msra.mxu0 %v1024
    %1090 = vmatprep.subr.mxu0 %v1027
    %1091 = vmatpush1.msra.mxu0 %v1026
    %1092 = vmatprep.subr.mxu0 %v1029
    %1093 = vmatpush1.msra.mxu0 %v1028
    %1094 = vmatprep.subr.mxu0 %v1031
    %1095 = vmatpush1.msra.mxu0 %v1030
    %1096 = vmatprep.mubr.f32.mxu0 %v966
    %1097 = vmatmul.mubr.f32.gmra.mrb[0].mxu0 %v965
    %v1098 = vpop.f32.mrb[0].mxu0
    %v1099 = vadd.f32 0.0, %v1098
    %v1100 = vpop.f32.mrb[0].mxu0
    %v1101 = vadd.f32 0.0, %v1100
    %1102 = vdwg.mxu0
    %s1103 = scalar_lea.vmem %s4, 2
    %v1104 = vld [vmem:[%s1103] sm:$0x3]
    %s1105 = scalar_lea.vmem %s5, 2
    %v1106 = vld [vmem:[%s1105] sm:$0x3]
    %1107 = vmatprep.subr.mxu0 %v109
    %1108 = vmatpush1.msra.mxu0 %v108
    %1109 = vmatprep.subr.mxu0 %v111
    %1110 = vmatpush1.msra.mxu0 %v110
    %1111 = vmatprep.subr.mxu0 %v113
    %1112 = vmatpush1.msra.mxu0 %v112
    %1113 = vmatprep.subr.mxu0 %v115
    %1114 = vmatpush1.msra.mxu0 %v114
    %1115 = vmatprep.subr.mxu0 %v117
    %1116 = vmatpush1.msra.mxu0 %v116
    %1117 = vmatprep.subr.mxu0 %v119
    %1118 = vmatpush1.msra.mxu0 %v118
    %1119 = vmatprep.subr.mxu0 %v121
    %1120 = vmatpush1.msra.mxu0 %v120
    %1121 = vmatprep.subr.mxu0 %v123
    %1122 = vmatpush1.msra.mxu0 %v122
    %1123 = vmatprep.subr.mxu0 %v125
    %1124 = vmatpush1.msra.mxu0 %v124
    %1125 = vmatprep.subr.mxu0 %v127
    %1126 = vmatpush1.msra.mxu0 %v126
    %1127 = vmatprep.subr.mxu0 %v129
    %1128 = vmatpush1.msra.mxu0 %v128
    %1129 = vmatprep.subr.mxu0 %v131
    %1130 = vmatpush1.msra.mxu0 %v130
    %1131 = vmatprep.subr.mxu0 %v133
    %1132 = vmatpush1.msra.mxu0 %v132
    %1133 = vmatprep.subr.mxu0 %v135
    %1134 = vmatpush1.msra.mxu0 %v134
    %1135 = vmatprep.subr.mxu0 %v137
    %1136 = vmatpush1.msra.mxu0 %v136
    %1137 = vmatprep.subr.mxu0 %v139
    %1138 = vmatpush1.msra.mxu0 %v138
    %1139 = vmatprep.subr.mxu0 %v141
    %1140 = vmatpush1.msra.mxu0 %v140
    %1141 = vmatprep.subr.mxu0 %v143
    %1142 = vmatpush1.msra.mxu0 %v142
    %1143 = vmatprep.subr.mxu0 %v145
    %1144 = vmatpush1.msra.mxu0 %v144
    %1145 = vmatprep.subr.mxu0 %v147
    %1146 = vmatpush1.msra.mxu0 %v146
    %1147 = vmatprep.subr.mxu0 %v149
    %1148 = vmatpush1.msra.mxu0 %v148
    %1149 = vmatprep.subr.mxu0 %v151
    %1150 = vmatpush1.msra.mxu0 %v150
    %1151 = vmatprep.subr.mxu0 %v153
    %1152 = vmatpush1.msra.mxu0 %v152
    %1153 = vmatprep.subr.mxu0 %v155
    %1154 = vmatpush1.msra.mxu0 %v154
    %1155 = vmatprep.subr.mxu0 %v157
    %1156 = vmatpush1.msra.mxu0 %v156
    %1157 = vmatprep.subr.mxu0 %v159
    %1158 = vmatpush1.msra.mxu0 %v158
    %1159 = vmatprep.subr.mxu0 %v161
    %1160 = vmatpush1.msra.mxu0 %v160
    %1161 = vmatprep.subr.mxu0 %v163
    %1162 = vmatpush1.msra.mxu0 %v162
    %1163 = vmatprep.subr.mxu0 %v165
    %1164 = vmatpush1.msra.mxu0 %v164
    %1165 = vmatprep.subr.mxu0 %v167
    %1166 = vmatpush1.msra.mxu0 %v166
    %1167 = vmatprep.subr.mxu0 %v169
    %1168 = vmatpush1.msra.mxu0 %v168
    %1169 = vmatprep.subr.mxu0 %v171
    %1170 = vmatpush1.msra.mxu0 %v170
    %1171 = vmatprep.mubr.f32.mxu0 %v1101
    %1172 = vmatmul.mubr.f32.gmra.mrb[0].mxu0 %v1099
    %v1173 = vpop.f32.mrb[0].mxu0
    %v1174 = vadd.f32 0.0, %v1173
    %v1175 = vpop.f32.mrb[0].mxu0
    %v1176 = vadd.f32 0.0, %v1175
    %1177 = vdwg.mxu0
    %v1178 = vsub.f32 %v1099, %v1174
    %v1179 = vsub.f32 %v1101, %v1176
    %v1180 = vmul.f32 %v1178, %v1178
    %v1181 = vmul.f32 %v1179, %v1179
    %1182 = vmatprep.subr.mxu0 %v109
    %1183 = vmatpush1.msra.mxu0 %v108
    %1184 = vmatprep.subr.mxu0 %v111
    %1185 = vmatpush1.msra.mxu0 %v110
    %1186 = vmatprep.subr.mxu0 %v113
    %1187 = vmatpush1.msra.mxu0 %v112
    %1188 = vmatprep.subr.mxu0 %v115
    %1189 = vmatpush1.msra.mxu0 %v114
    %1190 = vmatprep.subr.mxu0 %v117
    %1191 = vmatpush1.msra.mxu0 %v116
    %1192 = vmatprep.subr.mxu0 %v119
    %1193 = vmatpush1.msra.mxu0 %v118
    %1194 = vmatprep.subr.mxu0 %v121
    %1195 = vmatpush1.msra.mxu0 %v120
    %1196 = vmatprep.subr.mxu0 %v123
    %1197 = vmatpush1.msra.mxu0 %v122
    %1198 = vmatprep.subr.mxu0 %v125
    %1199 = vmatpush1.msra.mxu0 %v124
    %1200 = vmatprep.subr.mxu0 %v127
    %1201 = vmatpush1.msra.mxu0 %v126
    %1202 = vmatprep.subr.mxu0 %v129
    %1203 = vmatpush1.msra.mxu0 %v128
    %1204 = vmatprep.subr.mxu0 %v131
    %1205 = vmatpush1.msra.mxu0 %v130
    %1206 = vmatprep.subr.mxu0 %v133
    %1207 = vmatpush1.msra.mxu0 %v132
    %1208 = vmatprep.subr.mxu0 %v135
    %1209 = vmatpush1.msra.mxu0 %v134
    %1210 = vmatprep.subr.mxu0 %v137
    %1211 = vmatpush1.msra.mxu0 %v136
    %1212 = vmatprep.subr.mxu0 %v139
    %1213 = vmatpush1.msra.mxu0 %v138
    %1214 = vmatprep.subr.mxu0 %v141
    %1215 = vmatpush1.msra.mxu0 %v140
    %1216 = vmatprep.subr.mxu0 %v143
    %1217 = vmatpush1.msra.mxu0 %v142
    %1218 = vmatprep.subr.mxu0 %v145
    %1219 = vmatpush1.msra.mxu0 %v144
    %1220 = vmatprep.subr.mxu0 %v147
    %1221 = vmatpush1.msra.mxu0 %v146
    %1222 = vmatprep.subr.mxu0 %v149
    %1223 = vmatpush1.msra.mxu0 %v148
    %1224 = vmatprep.subr.mxu0 %v151
    %1225 = vmatpush1.msra.mxu0 %v150
    %1226 = vmatprep.subr.mxu0 %v153
    %1227 = vmatpush1.msra.mxu0 %v152
    %1228 = vmatprep.subr.mxu0 %v155
    %1229 = vmatpush1.msra.mxu0 %v154
    %1230 = vmatprep.subr.mxu0 %v157
    %1231 = vmatpush1.msra.mxu0 %v156
    %1232 = vmatprep.subr.mxu0 %v159
    %1233 = vmatpush1.msra.mxu0 %v158
    %1234 = vmatprep.subr.mxu0 %v161
    %1235 = vmatpush1.msra.mxu0 %v160
    %1236 = vmatprep.subr.mxu0 %v163
    %1237 = vmatpush1.msra.mxu0 %v162
    %1238 = vmatprep.subr.mxu0 %v165
    %1239 = vmatpush1.msra.mxu0 %v164
    %1240 = vmatprep.subr.mxu0 %v167
    %1241 = vmatpush1.msra.mxu0 %v166
    %1242 = vmatprep.subr.mxu0 %v169
    %1243 = vmatpush1.msra.mxu0 %v168
    %1244 = vmatprep.subr.mxu0 %v171
    %1245 = vmatpush1.msra.mxu0 %v170
    %1246 = vmatprep.mubr.f32.mxu0 %v1181
    %1247 = vmatmul.mubr.f32.gmra.mrb[0].mxu0 %v1180
    %v1248 = vpop.f32.mrb[0].mxu0
    %v1249 = vadd.f32 1e-05, %v1248
    %v1250 = vpop.f32.mrb[0].mxu0
    %v1251 = vadd.f32 1e-05, %v1250
    %1252 = vdwg.mxu0
    %v1253 = vrsqrt.pop %v1249
    %v1254 = vrsqrt.pop %v1251
    %v1255 = vmul.f32 %v1178, %v1253
    %v1256 = vmul.f32 %v1179, %v1254
    %v1258 = vlaneseq
    %v1259 = vshrl.u32 %v1258, 7
    %v1260 = vsub.s32 0, %v1259
    %v1261 = vrot.slane %v1104, %v1260
    %v1262 = vlaneseq
    %v1263 = vshrl.u32 %v1262, 7
    %v1264 = vsub.s32 1, %v1263
    %v1265 = vrot.slane %v1104, %v1264
    %v1268 = vmul.f32 %v1255, %v1261
    %v1269 = vmul.f32 %v1256, %v1265
    %v1271 = vlaneseq
    %v1272 = vshrl.u32 %v1271, 7
    %v1273 = vsub.s32 0, %v1272
    %v1274 = vrot.slane %v1106, %v1273
    %v1275 = vlaneseq
    %v1276 = vshrl.u32 %v1275, 7
    %v1277 = vsub.s32 1, %v1276
    %v1278 = vrot.slane %v1106, %v1277
    %v1281 = vadd.f32 %v1268, %v1274
    %v1282 = vadd.f32 %v1269, %v1278
    %v1283 = vadd.f32 %v963, %v1281
    %v1284 = vadd.f32 %v964, %v1282
    %s1285 = scalar_lea.vmem [#allocation2], 512
    %v1286 = vld [vmem:[%s1285] sm:$0xff]
    %v1287 = vld [vmem:[%s1285 + $0x8] sm:$0xff]
    %v1288 = vld [vmem:[%s1285 + $0x10] sm:$0xff]
    %v1289 = vld [vmem:[%s1285 + $0x18] sm:$0xff]
    %v1290 = vld [vmem:[%s1285 + $0x20] sm:$0xff]
    %v1291 = vld [vmem:[%s1285 + $0x28] sm:$0xff]
    %v1292 = vld [vmem:[%s1285 + $0x30] sm:$0xff]
    %v1293 = vld [vmem:[%s1285 + $0x38] sm:$0xff]
    %v1294 = vld [vmem:[%s1285 + $0x40] sm:$0xff]
    %v1295 = vld [vmem:[%s1285 + $0x48] sm:$0xff]
    %v1296 = vld [vmem:[%s1285 + $0x50] sm:$0xff]
    %v1297 = vld [vmem:[%s1285 + $0x58] sm:$0xff]
    %v1298 = vld [vmem:[%s1285 + $0x60] sm:$0xff]
    %v1299 = vld [vmem:[%s1285 + $0x68] sm:$0xff]
    %v1300 = vld [vmem:[%s1285 + $0x70] sm:$0xff]
    %v1301 = vld [vmem:[%s1285 + $0x78] sm:$0xff]
    %v1302 = vld [vmem:[%s1285 + $0x80] sm:$0xff]
    %v1303 = vld [vmem:[%s1285 + $0x88] sm:$0xff]
    %v1304 = vld [vmem:[%s1285 + $0x90] sm:$0xff]
    %v1305 = vld [vmem:[%s1285 + $0x98] sm:$0xff]
    %v1306 = vld [vmem:[%s1285 + $0xa0] sm:$0xff]
    %v1307 = vld [vmem:[%s1285 + $0xa8] sm:$0xff]
    %v1308 = vld [vmem:[%s1285 + $0xb0] sm:$0xff]
    %v1309 = vld [vmem:[%s1285 + $0xb8] sm:$0xff]
    %v1310 = vld [vmem:[%s1285 + $0xc0] sm:$0xff]
    %v1311 = vld [vmem:[%s1285 + $0xc8] sm:$0xff]
    %v1312 = vld [vmem:[%s1285 + $0xd0] sm:$0xff]
    %v1313 = vld [vmem:[%s1285 + $0xd8] sm:$0xff]
    %v1314 = vld [vmem:[%s1285 + $0xe0] sm:$0xff]
    %v1315 = vld [vmem:[%s1285 + $0xe8] sm:$0xff]
    %v1316 = vld [vmem:[%s1285 + $0xf0] sm:$0xff]
    %v1317 = vld [vmem:[%s1285 + $0xf8] sm:$0xff]
    %v1318 = vld [vmem:[%s1285 + $0x100] sm:$0xff]
    %v1319 = vld [vmem:[%s1285 + $0x108] sm:$0xff]
    %v1320 = vld [vmem:[%s1285 + $0x110] sm:$0xff]
    %v1321 = vld [vmem:[%s1285 + $0x118] sm:$0xff]
    %v1322 = vld [vmem:[%s1285 + $0x120] sm:$0xff]
    %v1323 = vld [vmem:[%s1285 + $0x128] sm:$0xff]
    %v1324 = vld [vmem:[%s1285 + $0x130] sm:$0xff]
    %v1325 = vld [vmem:[%s1285 + $0x138] sm:$0xff]
    %v1326 = vld [vmem:[%s1285 + $0x140] sm:$0xff]
    %v1327 = vld [vmem:[%s1285 + $0x148] sm:$0xff]
    %v1328 = vld [vmem:[%s1285 + $0x150] sm:$0xff]
    %v1329 = vld [vmem:[%s1285 + $0x158] sm:$0xff]
    %v1330 = vld [vmem:[%s1285 + $0x160] sm:$0xff]
    %v1331 = vld [vmem:[%s1285 + $0x168] sm:$0xff]
    %v1332 = vld [vmem:[%s1285 + $0x170] sm:$0xff]
    %v1333 = vld [vmem:[%s1285 + $0x178] sm:$0xff]
    %v1334 = vld [vmem:[%s1285 + $0x180] sm:$0xff]
    %v1335 = vld [vmem:[%s1285 + $0x188] sm:$0xff]
    %v1336 = vld [vmem:[%s1285 + $0x190] sm:$0xff]
    %v1337 = vld [vmem:[%s1285 + $0x198] sm:$0xff]
    %v1338 = vld [vmem:[%s1285 + $0x1a0] sm:$0xff]
    %v1339 = vld [vmem:[%s1285 + $0x1a8] sm:$0xff]
    %v1340 = vld [vmem:[%s1285 + $0x1b0] sm:$0xff]
    %v1341 = vld [vmem:[%s1285 + $0x1b8] sm:$0xff]
    %v1342 = vld [vmem:[%s1285 + $0x1c0] sm:$0xff]
    %v1343 = vld [vmem:[%s1285 + $0x1c8] sm:$0xff]
    %v1344 = vld [vmem:[%s1285 + $0x1d0] sm:$0xff]
    %v1345 = vld [vmem:[%s1285 + $0x1d8] sm:$0xff]
    %v1346 = vld [vmem:[%s1285 + $0x1e0] sm:$0xff]
    %v1347 = vld [vmem:[%s1285 + $0x1e8] sm:$0xff]
    %v1348 = vld [vmem:[%s1285 + $0x1f0] sm:$0xff]
    %v1349 = vld [vmem:[%s1285 + $0x1f8] sm:$0xff]
    %s1350 = scalar_lea.vmem %s7, 2
    %v1351 = vld [vmem:[%s1350] sm:$0x3]
    %v1353 = vlaneseq
    %v1354 = vshrl.u32 %v1353, 7
    %v1355 = vsub.s32 0, %v1354
    %v1356 = vrot.slane %v1351, %v1355
    %v1357 = vlaneseq
    %v1358 = vshrl.u32 %v1357, 7
    %v1359 = vsub.s32 1, %v1358
    %v1360 = vrot.slane %v1351, %v1359
    %1363 = vmatprep.subr.mxu0 %v1287
    %1364 = vmatpush1.msra.mxu0 %v1286
    %1365 = vmatprep.subr.mxu0 %v1289
    %1366 = vmatpush1.msra.mxu0 %v1288
    %1367 = vmatprep.subr.mxu0 %v1291
    %1368 = vmatpush1.msra.mxu0 %v1290
    %1369 = vmatprep.subr.mxu0 %v1293
    %1370 = vmatpush1.msra.mxu0 %v1292
    %1371 = vmatprep.subr.mxu0 %v1295
    %1372 = vmatpush1.msra.mxu0 %v1294
    %1373 = vmatprep.subr.mxu0 %v1297
    %1374 = vmatpush1.msra.mxu0 %v1296
    %1375 = vmatprep.subr.mxu0 %v1299
    %1376 = vmatpush1.msra.mxu0 %v1298
    %1377 = vmatprep.subr.mxu0 %v1301
    %1378 = vmatpush1.msra.mxu0 %v1300
    %1379 = vmatprep.subr.mxu0 %v1303
    %1380 = vmatpush1.msra.mxu0 %v1302
    %1381 = vmatprep.subr.mxu0 %v1305
    %1382 = vmatpush1.msra.mxu0 %v1304
    %1383 = vmatprep.subr.mxu0 %v1307
    %1384 = vmatpush1.msra.mxu0 %v1306
    %1385 = vmatprep.subr.mxu0 %v1309
    %1386 = vmatpush1.msra.mxu0 %v1308
    %1387 = vmatprep.subr.mxu0 %v1311
    %1388 = vmatpush1.msra.mxu0 %v1310
    %1389 = vmatprep.subr.mxu0 %v1313
    %1390 = vmatpush1.msra.mxu0 %v1312
    %1391 = vmatprep.subr.mxu0 %v1315
    %1392 = vmatpush1.msra.mxu0 %v1314
    %1393 = vmatprep.subr.mxu0 %v1317
    %1394 = vmatpush1.msra.mxu0 %v1316
    %1395 = vmatprep.subr.mxu0 %v1319
    %1396 = vmatpush1.msra.mxu0 %v1318
    %1397 = vmatprep.subr.mxu0 %v1321
    %1398 = vmatpush1.msra.mxu0 %v1320
    %1399 = vmatprep.subr.mxu0 %v1323
    %1400 = vmatpush1.msra.mxu0 %v1322
    %1401 = vmatprep.subr.mxu0 %v1325
    %1402 = vmatpush1.msra.mxu0 %v1324
    %1403 = vmatprep.subr.mxu0 %v1327
    %1404 = vmatpush1.msra.mxu0 %v1326
    %1405 = vmatprep.subr.mxu0 %v1329
    %1406 = vmatpush1.msra.mxu0 %v1328
    %1407 = vmatprep.subr.mxu0 %v1331
    %1408 = vmatpush1.msra.mxu0 %v1330
    %1409 = vmatprep.subr.mxu0 %v1333
    %1410 = vmatpush1.msra.mxu0 %v1332
    %1411 = vmatprep.subr.mxu0 %v1335
    %1412 = vmatpush1.msra.mxu0 %v1334
    %1413 = vmatprep.subr.mxu0 %v1337
    %1414 = vmatpush1.msra.mxu0 %v1336
    %1415 = vmatprep.subr.mxu0 %v1339
    %1416 = vmatpush1.msra.mxu0 %v1338
    %1417 = vmatprep.subr.mxu0 %v1341
    %1418 = vmatpush1.msra.mxu0 %v1340
    %1419 = vmatprep.subr.mxu0 %v1343
    %1420 = vmatpush1.msra.mxu0 %v1342
    %1421 = vmatprep.subr.mxu0 %v1345
    %1422 = vmatpush1.msra.mxu0 %v1344
    %1423 = vmatprep.subr.mxu0 %v1347
    %1424 = vmatpush1.msra.mxu0 %v1346
    %1425 = vmatprep.subr.mxu0 %v1349
    %1426 = vmatpush1.msra.mxu0 %v1348
    %1427 = vmatprep.mubr.f32.mxu0 %v1284
    %1428 = vmatmul.mubr.f32.gmra.mrb[0].mxu0 %v1283
    %v1429 = vpop.f32.mrb[0].mxu0
    %v1430 = vadd.f32 %v1356, %v1429
    %v1431 = vpop.f32.mrb[0].mxu0
    %v1432 = vadd.f32 %v1360, %v1431
    %1433 = vdwg.mxu0
    %v1434 = vmax.f32 %v1430, 0.0
    %v1435 = vmax.f32 %v1432, 0.0
    %s1436 = scalar_lea.vmem [#allocation4], 512
    %v1437 = vld [vmem:[%s1436] sm:$0xff]
    %v1438 = vld [vmem:[%s1436 + $0x8] sm:$0xff]
    %v1439 = vld [vmem:[%s1436 + $0x10] sm:$0xff]
    %v1440 = vld [vmem:[%s1436 + $0x18] sm:$0xff]
    %v1441 = vld [vmem:[%s1436 + $0x20] sm:$0xff]
    %v1442 = vld [vmem:[%s1436 + $0x28] sm:$0xff]
    %v1443 = vld [vmem:[%s1436 + $0x30] sm:$0xff]
    %v1444 = vld [vmem:[%s1436 + $0x38] sm:$0xff]
    %v1445 = vld [vmem:[%s1436 + $0x40] sm:$0xff]
    %v1446 = vld [vmem:[%s1436 + $0x48] sm:$0xff]
    %v1447 = vld [vmem:[%s1436 + $0x50] sm:$0xff]
    %v1448 = vld [vmem:[%s1436 + $0x58] sm:$0xff]
    %v1449 = vld [vmem:[%s1436 + $0x60] sm:$0xff]
    %v1450 = vld [vmem:[%s1436 + $0x68] sm:$0xff]
    %v1451 = vld [vmem:[%s1436 + $0x70] sm:$0xff]
    %v1452 = vld [vmem:[%s1436 + $0x78] sm:$0xff]
    %v1453 = vld [vmem:[%s1436 + $0x80] sm:$0xff]
    %v1454 = vld [vmem:[%s1436 + $0x88] sm:$0xff]
    %v1455 = vld [vmem:[%s1436 + $0x90] sm:$0xff]
    %v1456 = vld [vmem:[%s1436 + $0x98] sm:$0xff]
    %v1457 = vld [vmem:[%s1436 + $0xa0] sm:$0xff]
    %v1458 = vld [vmem:[%s1436 + $0xa8] sm:$0xff]
    %v1459 = vld [vmem:[%s1436 + $0xb0] sm:$0xff]
    %v1460 = vld [vmem:[%s1436 + $0xb8] sm:$0xff]
    %v1461 = vld [vmem:[%s1436 + $0xc0] sm:$0xff]
    %v1462 = vld [vmem:[%s1436 + $0xc8] sm:$0xff]
    %v1463 = vld [vmem:[%s1436 + $0xd0] sm:$0xff]
    %v1464 = vld [vmem:[%s1436 + $0xd8] sm:$0xff]
    %v1465 = vld [vmem:[%s1436 + $0xe0] sm:$0xff]
    %v1466 = vld [vmem:[%s1436 + $0xe8] sm:$0xff]
    %v1467 = vld [vmem:[%s1436 + $0xf0] sm:$0xff]
    %v1468 = vld [vmem:[%s1436 + $0xf8] sm:$0xff]
    %v1469 = vld [vmem:[%s1436 + $0x100] sm:$0xff]
    %v1470 = vld [vmem:[%s1436 + $0x108] sm:$0xff]
    %v1471 = vld [vmem:[%s1436 + $0x110] sm:$0xff]
    %v1472 = vld [vmem:[%s1436 + $0x118] sm:$0xff]
    %v1473 = vld [vmem:[%s1436 + $0x120] sm:$0xff]
    %v1474 = vld [vmem:[%s1436 + $0x128] sm:$0xff]
    %v1475 = vld [vmem:[%s1436 + $0x130] sm:$0xff]
    %v1476 = vld [vmem:[%s1436 + $0x138] sm:$0xff]
    %v1477 = vld [vmem:[%s1436 + $0x140] sm:$0xff]
    %v1478 = vld [vmem:[%s1436 + $0x148] sm:$0xff]
    %v1479 = vld [vmem:[%s1436 + $0x150] sm:$0xff]
    %v1480 = vld [vmem:[%s1436 + $0x158] sm:$0xff]
    %v1481 = vld [vmem:[%s1436 + $0x160] sm:$0xff]
    %v1482 = vld [vmem:[%s1436 + $0x168] sm:$0xff]
    %v1483 = vld [vmem:[%s1436 + $0x170] sm:$0xff]
    %v1484 = vld [vmem:[%s1436 + $0x178] sm:$0xff]
    %v1485 = vld [vmem:[%s1436 + $0x180] sm:$0xff]
    %v1486 = vld [vmem:[%s1436 + $0x188] sm:$0xff]
    %v1487 = vld [vmem:[%s1436 + $0x190] sm:$0xff]
    %v1488 = vld [vmem:[%s1436 + $0x198] sm:$0xff]
    %v1489 = vld [vmem:[%s1436 + $0x1a0] sm:$0xff]
    %v1490 = vld [vmem:[%s1436 + $0x1a8] sm:$0xff]
    %v1491 = vld [vmem:[%s1436 + $0x1b0] sm:$0xff]
    %v1492 = vld [vmem:[%s1436 + $0x1b8] sm:$0xff]
    %v1493 = vld [vmem:[%s1436 + $0x1c0] sm:$0xff]
    %v1494 = vld [vmem:[%s1436 + $0x1c8] sm:$0xff]
    %v1495 = vld [vmem:[%s1436 + $0x1d0] sm:$0xff]
    %v1496 = vld [vmem:[%s1436 + $0x1d8] sm:$0xff]
    %v1497 = vld [vmem:[%s1436 + $0x1e0] sm:$0xff]
    %v1498 = vld [vmem:[%s1436 + $0x1e8] sm:$0xff]
    %v1499 = vld [vmem:[%s1436 + $0x1f0] sm:$0xff]
    %v1500 = vld [vmem:[%s1436 + $0x1f8] sm:$0xff]
    %s1501 = scalar_lea.vmem %s9, 2
    %v1502 = vld [vmem:[%s1501] sm:$0x3]
    %v1504 = vlaneseq
    %v1505 = vshrl.u32 %v1504, 7
    %v1506 = vsub.s32 0, %v1505
    %v1507 = vrot.slane %v1502, %v1506
    %v1508 = vlaneseq
    %v1509 = vshrl.u32 %v1508, 7
    %v1510 = vsub.s32 1, %v1509
    %v1511 = vrot.slane %v1502, %v1510
    %1514 = vmatprep.subr.mxu0 %v1438
    %1515 = vmatpush1.msra.mxu0 %v1437
    %1516 = vmatprep.subr.mxu0 %v1440
    %1517 = vmatpush1.msra.mxu0 %v1439
    %1518 = vmatprep.subr.mxu0 %v1442
    %1519 = vmatpush1.msra.mxu0 %v1441
    %1520 = vmatprep.subr.mxu0 %v1444
    %1521 = vmatpush1.msra.mxu0 %v1443
    %1522 = vmatprep.subr.mxu0 %v1446
    %1523 = vmatpush1.msra.mxu0 %v1445
    %1524 = vmatprep.subr.mxu0 %v1448
    %1525 = vmatpush1.msra.mxu0 %v1447
    %1526 = vmatprep.subr.mxu0 %v1450
    %1527 = vmatpush1.msra.mxu0 %v1449
    %1528 = vmatprep.subr.mxu0 %v1452
    %1529 = vmatpush1.msra.mxu0 %v1451
    %1530 = vmatprep.subr.mxu0 %v1454
    %1531 = vmatpush1.msra.mxu0 %v1453
    %1532 = vmatprep.subr.mxu0 %v1456
    %1533 = vmatpush1.msra.mxu0 %v1455
    %1534 = vmatprep.subr.mxu0 %v1458
    %1535 = vmatpush1.msra.mxu0 %v1457
    %1536 = vmatprep.subr.mxu0 %v1460
    %1537 = vmatpush1.msra.mxu0 %v1459
    %1538 = vmatprep.subr.mxu0 %v1462
    %1539 = vmatpush1.msra.mxu0 %v1461
    %1540 = vmatprep.subr.mxu0 %v1464
    %1541 = vmatpush1.msra.mxu0 %v1463
    %1542 = vmatprep.subr.mxu0 %v1466
    %1543 = vmatpush1.msra.mxu0 %v1465
    %1544 = vmatprep.subr.mxu0 %v1468
    %1545 = vmatpush1.msra.mxu0 %v1467
    %1546 = vmatprep.subr.mxu0 %v1470
    %1547 = vmatpush1.msra.mxu0 %v1469
    %1548 = vmatprep.subr.mxu0 %v1472
    %1549 = vmatpush1.msra.mxu0 %v1471
    %1550 = vmatprep.subr.mxu0 %v1474
    %1551 = vmatpush1.msra.mxu0 %v1473
    %1552 = vmatprep.subr.mxu0 %v1476
    %1553 = vmatpush1.msra.mxu0 %v1475
    %1554 = vmatprep.subr.mxu0 %v1478
    %1555 = vmatpush1.msra.mxu0 %v1477
    %1556 = vmatprep.subr.mxu0 %v1480
    %1557 = vmatpush1.msra.mxu0 %v1479
    %1558 = vmatprep.subr.mxu0 %v1482
    %1559 = vmatpush1.msra.mxu0 %v1481
    %1560 = vmatprep.subr.mxu0 %v1484
    %1561 = vmatpush1.msra.mxu0 %v1483
    %1562 = vmatprep.subr.mxu0 %v1486
    %1563 = vmatpush1.msra.mxu0 %v1485
    %1564 = vmatprep.subr.mxu0 %v1488
    %1565 = vmatpush1.msra.mxu0 %v1487
    %1566 = vmatprep.subr.mxu0 %v1490
    %1567 = vmatpush1.msra.mxu0 %v1489
    %1568 = vmatprep.subr.mxu0 %v1492
    %1569 = vmatpush1.msra.mxu0 %v1491
    %1570 = vmatprep.subr.mxu0 %v1494
    %1571 = vmatpush1.msra.mxu0 %v1493
    %1572 = vmatprep.subr.mxu0 %v1496
    %1573 = vmatpush1.msra.mxu0 %v1495
    %1574 = vmatprep.subr.mxu0 %v1498
    %1575 = vmatpush1.msra.mxu0 %v1497
    %1576 = vmatprep.subr.mxu0 %v1500
    %1577 = vmatpush1.msra.mxu0 %v1499
    %1578 = vmatprep.mubr.f32.mxu0 %v1435
    %1579 = vmatmul.mubr.f32.gmra.mrb[0].mxu0 %v1434
    %v1580 = vpop.f32.mrb[0].mxu0
    %v1581 = vadd.f32 %v1507, %v1580
    %v1582 = vpop.f32.mrb[0].mxu0
    %v1583 = vadd.f32 %v1511, %v1582
    %1584 = vdwg.mxu0
    %s1585 = scalar_lea.vmem %s10, 2
    %v1586 = vld [vmem:[%s1585] sm:$0x3]
    %s1587 = scalar_lea.vmem %s11, 2
    %v1588 = vld [vmem:[%s1587] sm:$0x3]
    %1589 = vmatprep.subr.mxu0 %v109
    %1590 = vmatpush1.msra.mxu0 %v108
    %1591 = vmatprep.subr.mxu0 %v111
    %1592 = vmatpush1.msra.mxu0 %v110
    %1593 = vmatprep.subr.mxu0 %v113
    %1594 = vmatpush1.msra.mxu0 %v112
    %1595 = vmatprep.subr.mxu0 %v115
    %1596 = vmatpush1.msra.mxu0 %v114
    %1597 = vmatprep.subr.mxu0 %v117
    %1598 = vmatpush1.msra.mxu0 %v116
    %1599 = vmatprep.subr.mxu0 %v119
    %1600 = vmatpush1.msra.mxu0 %v118
    %1601 = vmatprep.subr.mxu0 %v121
    %1602 = vmatpush1.msra.mxu0 %v120
    %1603 = vmatprep.subr.mxu0 %v123
    %1604 = vmatpush1.msra.mxu0 %v122
    %1605 = vmatprep.subr.mxu0 %v125
    %1606 = vmatpush1.msra.mxu0 %v124
    %1607 = vmatprep.subr.mxu0 %v127
    %1608 = vmatpush1.msra.mxu0 %v126
    %1609 = vmatprep.subr.mxu0 %v129
    %1610 = vmatpush1.msra.mxu0 %v128
    %1611 = vmatprep.subr.mxu0 %v131
    %1612 = vmatpush1.msra.mxu0 %v130
    %1613 = vmatprep.subr.mxu0 %v133
    %1614 = vmatpush1.msra.mxu0 %v132
    %1615 = vmatprep.subr.mxu0 %v135
    %1616 = vmatpush1.msra.mxu0 %v134
    %1617 = vmatprep.subr.mxu0 %v137
    %1618 = vmatpush1.msra.mxu0 %v136
    %1619 = vmatprep.subr.mxu0 %v139
    %1620 = vmatpush1.msra.mxu0 %v138
    %1621 = vmatprep.subr.mxu0 %v141
    %1622 = vmatpush1.msra.mxu0 %v140
    %1623 = vmatprep.subr.mxu0 %v143
    %1624 = vmatpush1.msra.mxu0 %v142
    %1625 = vmatprep.subr.mxu0 %v145
    %1626 = vmatpush1.msra.mxu0 %v144
    %1627 = vmatprep.subr.mxu0 %v147
    %1628 = vmatpush1.msra.mxu0 %v146
    %1629 = vmatprep.subr.mxu0 %v149
    %1630 = vmatpush1.msra.mxu0 %v148
    %1631 = vmatprep.subr.mxu0 %v151
    %1632 = vmatpush1.msra.mxu0 %v150
    %1633 = vmatprep.subr.mxu0 %v153
    %1634 = vmatpush1.msra.mxu0 %v152
    %1635 = vmatprep.subr.mxu0 %v155
    %1636 = vmatpush1.msra.mxu0 %v154
    %1637 = vmatprep.subr.mxu0 %v157
    %1638 = vmatpush1.msra.mxu0 %v156
    %1639 = vmatprep.subr.mxu0 %v159
    %1640 = vmatpush1.msra.mxu0 %v158
    %1641 = vmatprep.subr.mxu0 %v161
    %1642 = vmatpush1.msra.mxu0 %v160
    %1643 = vmatprep.subr.mxu0 %v163
    %1644 = vmatpush1.msra.mxu0 %v162
    %1645 = vmatprep.subr.mxu0 %v165
    %1646 = vmatpush1.msra.mxu0 %v164
    %1647 = vmatprep.subr.mxu0 %v167
    %1648 = vmatpush1.msra.mxu0 %v166
    %1649 = vmatprep.subr.mxu0 %v169
    %1650 = vmatpush1.msra.mxu0 %v168
    %1651 = vmatprep.subr.mxu0 %v171
    %1652 = vmatpush1.msra.mxu0 %v170
    %1653 = vmatprep.mubr.f32.mxu0 %v1583
    %1654 = vmatmul.mubr.f32.gmra.mrb[0].mxu0 %v1581
    %v1655 = vpop.f32.mrb[0].mxu0
    %v1656 = vadd.f32 0.0, %v1655
    %v1657 = vpop.f32.mrb[0].mxu0
    %v1658 = vadd.f32 0.0, %v1657
    %1659 = vdwg.mxu0
    %v1660 = vsub.f32 %v1581, %v1656
    %v1661 = vsub.f32 %v1583, %v1658
    %v1662 = vmul.f32 %v1660, %v1660
    %v1663 = vmul.f32 %v1661, %v1661
    %1664 = vmatprep.subr.mxu0 %v109
    %1665 = vmatpush1.msra.mxu0 %v108
    %1666 = vmatprep.subr.mxu0 %v111
    %1667 = vmatpush1.msra.mxu0 %v110
    %1668 = vmatprep.subr.mxu0 %v113
    %1669 = vmatpush1.msra.mxu0 %v112
    %1670 = vmatprep.subr.mxu0 %v115
    %1671 = vmatpush1.msra.mxu0 %v114
    %1672 = vmatprep.subr.mxu0 %v117
    %1673 = vmatpush1.msra.mxu0 %v116
    %1674 = vmatprep.subr.mxu0 %v119
    %1675 = vmatpush1.msra.mxu0 %v118
    %1676 = vmatprep.subr.mxu0 %v121
    %1677 = vmatpush1.msra.mxu0 %v120
    %1678 = vmatprep.subr.mxu0 %v123
    %1679 = vmatpush1.msra.mxu0 %v122
    %1680 = vmatprep.subr.mxu0 %v125
    %1681 = vmatpush1.msra.mxu0 %v124
    %1682 = vmatprep.subr.mxu0 %v127
    %1683 = vmatpush1.msra.mxu0 %v126
    %1684 = vmatprep.subr.mxu0 %v129
    %1685 = vmatpush1.msra.mxu0 %v128
    %1686 = vmatprep.subr.mxu0 %v131
    %1687 = vmatpush1.msra.mxu0 %v130
    %1688 = vmatprep.subr.mxu0 %v133
    %1689 = vmatpush1.msra.mxu0 %v132
    %1690 = vmatprep.subr.mxu0 %v135
    %1691 = vmatpush1.msra.mxu0 %v134
    %1692 = vmatprep.subr.mxu0 %v137
    %1693 = vmatpush1.msra.mxu0 %v136
    %1694 = vmatprep.subr.mxu0 %v139
    %1695 = vmatpush1.msra.mxu0 %v138
    %1696 = vmatprep.subr.mxu0 %v141
    %1697 = vmatpush1.msra.mxu0 %v140
    %1698 = vmatprep.subr.mxu0 %v143
    %1699 = vmatpush1.msra.mxu0 %v142
    %1700 = vmatprep.subr.mxu0 %v145
    %1701 = vmatpush1.msra.mxu0 %v144
    %1702 = vmatprep.subr.mxu0 %v147
    %1703 = vmatpush1.msra.mxu0 %v146
    %1704 = vmatprep.subr.mxu0 %v149
    %1705 = vmatpush1.msra.mxu0 %v148
    %1706 = vmatprep.subr.mxu0 %v151
    %1707 = vmatpush1.msra.mxu0 %v150
    %1708 = vmatprep.subr.mxu0 %v153
    %1709 = vmatpush1.msra.mxu0 %v152
    %1710 = vmatprep.subr.mxu0 %v155
    %1711 = vmatpush1.msra.mxu0 %v154
    %1712 = vmatprep.subr.mxu0 %v157
    %1713 = vmatpush1.msra.mxu0 %v156
    %1714 = vmatprep.subr.mxu0 %v159
    %1715 = vmatpush1.msra.mxu0 %v158
    %1716 = vmatprep.subr.mxu0 %v161
    %1717 = vmatpush1.msra.mxu0 %v160
    %1718 = vmatprep.subr.mxu0 %v163
    %1719 = vmatpush1.msra.mxu0 %v162
    %1720 = vmatprep.subr.mxu0 %v165
    %1721 = vmatpush1.msra.mxu0 %v164
    %1722 = vmatprep.subr.mxu0 %v167
    %1723 = vmatpush1.msra.mxu0 %v166
    %1724 = vmatprep.subr.mxu0 %v169
    %1725 = vmatpush1.msra.mxu0 %v168
    %1726 = vmatprep.subr.mxu0 %v171
    %1727 = vmatpush1.msra.mxu0 %v170
    %1728 = vmatprep.mubr.f32.mxu0 %v1663
    %1729 = vmatmul.mubr.f32.gmra.mrb[0].mxu0 %v1662
    %v1730 = vpop.f32.mrb[0].mxu0
    %v1731 = vadd.f32 1e-05, %v1730
    %v1732 = vpop.f32.mrb[0].mxu0
    %v1733 = vadd.f32 1e-05, %v1732
    %1734 = vdwg.mxu0
    %v1735 = vrsqrt.pop %v1731
    %v1736 = vrsqrt.pop %v1733
    %v1737 = vmul.f32 %v1660, %v1735
    %v1738 = vmul.f32 %v1661, %v1736
    %v1740 = vlaneseq
    %v1741 = vshrl.u32 %v1740, 7
    %v1742 = vsub.s32 0, %v1741
    %v1743 = vrot.slane %v1586, %v1742
    %v1744 = vlaneseq
    %v1745 = vshrl.u32 %v1744, 7
    %v1746 = vsub.s32 1, %v1745
    %v1747 = vrot.slane %v1586, %v1746
    %v1750 = vmul.f32 %v1737, %v1743
    %v1751 = vmul.f32 %v1738, %v1747
    %v1753 = vlaneseq
    %v1754 = vshrl.u32 %v1753, 7
    %v1755 = vsub.s32 0, %v1754
    %v1756 = vrot.slane %v1588, %v1755
    %v1757 = vlaneseq
    %v1758 = vshrl.u32 %v1757, 7
    %v1759 = vsub.s32 1, %v1758
    %v1760 = vrot.slane %v1588, %v1759
    %v1763 = vadd.f32 %v1750, %v1756
    %v1764 = vadd.f32 %v1751, %v1760
    %v1765 = vadd.f32 %v1283, %v1763
    %v1766 = vadd.f32 %v1284, %v1764
    %v1767 = vmul.f32 %v1765, %v106
    %v1768 = vmul.f32 %v1766, %v107
    %v1769 = vld [vmem:[#allocation7] sm:$0xff]
    %v1770 = vld [vmem:[#allocation7 + $0x8] sm:$0xff]
    %v1771 = vld [vmem:[#allocation7 + $0x10] sm:$0xff]
    %v1772 = vld [vmem:[#allocation7 + $0x18] sm:$0xff]
    %v1773 = vld [vmem:[#allocation7 + $0x20] sm:$0xff]
    %v1774 = vld [vmem:[#allocation7 + $0x28] sm:$0xff]
    %v1775 = vld [vmem:[#allocation7 + $0x30] sm:$0xff]
    %v1776 = vld [vmem:[#allocation7 + $0x38] sm:$0xff]
    %v1777 = vld [vmem:[#allocation7 + $0x40] sm:$0xff]
    %v1778 = vld [vmem:[#allocation7 + $0x48] sm:$0xff]
    %v1779 = vld [vmem:[#allocation7 + $0x50] sm:$0xff]
    %v1780 = vld [vmem:[#allocation7 + $0x58] sm:$0xff]
    %v1781 = vld [vmem:[#allocation7 + $0x60] sm:$0xff]
    %v1782 = vld [vmem:[#allocation7 + $0x68] sm:$0xff]
    %v1783 = vld [vmem:[#allocation7 + $0x70] sm:$0xff]
    %v1784 = vld [vmem:[#allocation7 + $0x78] sm:$0xff]
    %v1785 = vld [vmem:[#allocation7 + $0x80] sm:$0xff]
    %v1786 = vld [vmem:[#allocation7 + $0x88] sm:$0xff]
    %v1787 = vld [vmem:[#allocation7 + $0x90] sm:$0xff]
    %v1788 = vld [vmem:[#allocation7 + $0x98] sm:$0xff]
    %v1789 = vld [vmem:[#allocation7 + $0xa0] sm:$0xff]
    %v1790 = vld [vmem:[#allocation7 + $0xa8] sm:$0xff]
    %v1791 = vld [vmem:[#allocation7 + $0xb0] sm:$0xff]
    %v1792 = vld [vmem:[#allocation7 + $0xb8] sm:$0xff]
    %v1793 = vld [vmem:[#allocation7 + $0xc0] sm:$0xff]
    %v1794 = vld [vmem:[#allocation7 + $0xc8] sm:$0xff]
    %v1795 = vld [vmem:[#allocation7 + $0xd0] sm:$0xff]
    %v1796 = vld [vmem:[#allocation7 + $0xd8] sm:$0xff]
    %v1797 = vld [vmem:[#allocation7 + $0xe0] sm:$0xff]
    %v1798 = vld [vmem:[#allocation7 + $0xe8] sm:$0xff]
    %v1799 = vld [vmem:[#allocation7 + $0xf0] sm:$0xff]
    %v1800 = vld [vmem:[#allocation7 + $0xf8] sm:$0xff]
    %1801 = vmatprep.subr.mxu0 0.0
    %1802 = vmatpush1.msra.mxu0 %v1769
    %1803 = vmatprep.subr.mxu0 0.0
    %1804 = vmatpush1.msra.mxu0 %v1770
    %1805 = vmatprep.subr.mxu0 0.0
    %1806 = vmatpush1.msra.mxu0 %v1771
    %1807 = vmatprep.subr.mxu0 0.0
    %1808 = vmatpush1.msra.mxu0 %v1772
    %1809 = vmatprep.subr.mxu0 0.0
    %1810 = vmatpush1.msra.mxu0 %v1773
    %1811 = vmatprep.subr.mxu0 0.0
    %1812 = vmatpush1.msra.mxu0 %v1774
    %1813 = vmatprep.subr.mxu0 0.0
    %1814 = vmatpush1.msra.mxu0 %v1775
    %1815 = vmatprep.subr.mxu0 0.0
    %1816 = vmatpush1.msra.mxu0 %v1776
    %1817 = vmatprep.subr.mxu0 0.0
    %1818 = vmatpush1.msra.mxu0 %v1777
    %1819 = vmatprep.subr.mxu0 0.0
    %1820 = vmatpush1.msra.mxu0 %v1778
    %1821 = vmatprep.subr.mxu0 0.0
    %1822 = vmatpush1.msra.mxu0 %v1779
    %1823 = vmatprep.subr.mxu0 0.0
    %1824 = vmatpush1.msra.mxu0 %v1780
    %1825 = vmatprep.subr.mxu0 0.0
    %1826 = vmatpush1.msra.mxu0 %v1781
    %1827 = vmatprep.subr.mxu0 0.0
    %1828 = vmatpush1.msra.mxu0 %v1782
    %1829 = vmatprep.subr.mxu0 0.0
    %1830 = vmatpush1.msra.mxu0 %v1783
    %1831 = vmatprep.subr.mxu0 0.0
    %1832 = vmatpush1.msra.mxu0 %v1784
    %1833 = vmatprep.subr.mxu0 0.0
    %1834 = vmatpush1.msra.mxu0 %v1785
    %1835 = vmatprep.subr.mxu0 0.0
    %1836 = vmatpush1.msra.mxu0 %v1786
    %1837 = vmatprep.subr.mxu0 0.0
    %1838 = vmatpush1.msra.mxu0 %v1787
    %1839 = vmatprep.subr.mxu0 0.0
    %1840 = vmatpush1.msra.mxu0 %v1788
    %1841 = vmatprep.subr.mxu0 0.0
    %1842 = vmatpush1.msra.mxu0 %v1789
    %1843 = vmatprep.subr.mxu0 0.0
    %1844 = vmatpush1.msra.mxu0 %v1790
    %1845 = vmatprep.subr.mxu0 0.0
    %1846 = vmatpush1.msra.mxu0 %v1791
    %1847 = vmatprep.subr.mxu0 0.0
    %1848 = vmatpush1.msra.mxu0 %v1792
    %1849 = vmatprep.subr.mxu0 0.0
    %1850 = vmatpush1.msra.mxu0 %v1793
    %1851 = vmatprep.subr.mxu0 0.0
    %1852 = vmatpush1.msra.mxu0 %v1794
    %1853 = vmatprep.subr.mxu0 0.0
    %1854 = vmatpush1.msra.mxu0 %v1795
    %1855 = vmatprep.subr.mxu0 0.0
    %1856 = vmatpush1.msra.mxu0 %v1796
    %1857 = vmatprep.subr.mxu0 0.0
    %1858 = vmatpush1.msra.mxu0 %v1797
    %1859 = vmatprep.subr.mxu0 0.0
    %1860 = vmatpush1.msra.mxu0 %v1798
    %1861 = vmatprep.subr.mxu0 0.0
    %1862 = vmatpush1.msra.mxu0 %v1799
    %1863 = vmatprep.subr.mxu0 0.0
    %1864 = vmatpush1.msra.mxu0 %v1800
    %1865 = vmatprep.mubr.f32.mxu0 %v1768
    %1866 = vmatmul.mubr.f32.gmra.mrb[0].mxu0 %v1767
    %v1867 = vpop.f32.mrb[0].mxu0
    %v1868 = vadd.f32 0.0, %v1867
    %v1869 = vpop.f32.mrb[0].mxu0
    %1870 = vdwg.mxu0
    %1871 = vst [vmem:[%s14] sm:$0xff] %v1868
    // Predicated region
    $region74: #{pallas_forward.1} parent=1 // pred_check
      _
    $region75: #{pallas_forward.1} parent=1 // pred_check_branch
      %1873 = sbr.rel (0) target = $region77
    $region76: #{pallas_forward.1} parent=1 // pred_region
      _
    $region77: #{pallas_forward.1} parent=1 // pred_fallthru
      _
    // Predicated region
    $region78: #{pallas_forward.1} parent=1 // pred_check
      _
    $region79: #{pallas_forward.1} parent=1 // pred_check_branch
      %1875 = sbr.rel (0) target = $region81
    $region80: #{pallas_forward.1} parent=1 // pred_region
      _
    $region81: #{pallas_forward.1} parent=1 // pred_fallthru
      _
    %1876 = vsyncpa [#allocation3], 1
    %1877 = vsyncpa [#allocation5], 1
    %1878 = vsyncpa [#allocation8], 1

</llo_original>
